<compile_context>
chip_gen: v7x
topology: tpu7x:2x2x1
jax: 0.10.0
libtpu: 0.0.40
codegen_flags: <defaults>
</compile_context>

<pallas_src>
import jax
import jax.numpy as jnp
from jax.experimental import pallas as pl
from jax.experimental.pallas import tpu as pltpu

INPUT_DIM = 6   # ['Open', 'High', 'Low', 'Close', 'Volume', 'Daily Return']
HIDDEN = 16
DPAD = 8        # input feature dim zero-padded to the sublane quantum

# Row layout of the packed (32, 128) f32 parameter slab.
_ROW_WIH = 0     # rows 0:DPAD   lanes 0:4H -> W_ih^T (rows D..7 zero)
_ROW_WHH = 8     # rows 8:8+H    lanes 0:4H -> W_hh^T
_ROW_BIAS = 24   # row 24        lanes 0:4H -> b_ih + b_hh
_ROW_FCW = 25    # row 25        lanes 0:H  -> fc weight row
_ROW_FCB = 26    # row 26        lane 0     -> fc bias
# NOTE: g-gate columns [2H, 3H) of W_ih^T, W_hh^T and the bias are pre-scaled
# by 2 so the kernel can compute a single sigmoid over all 4H lanes and recover
# tanh(z) as 2*sigmoid(2z) - 1.


def _make_lstm_kernel(T, Bt, H):
    """Builds the kernel for static (T, batch-tile, H)."""

    def kernel(x_ref, p_ref, out_ref):
        # x_ref:   (T, Bt, DPAD) time-major input tile (VMEM)
        # p_ref:   (32, 128)     packed parameters (VMEM)
        # out_ref: (1, 1, Bt)    lane-dense output tile
        w_ih = p_ref[_ROW_WIH:_ROW_WIH + DPAD, 0:4 * H]      # (DPAD, 4H)
        w_hh = p_ref[_ROW_WHH:_ROW_WHH + H, 0:4 * H]         # (H, 4H)
        bias = p_ref[_ROW_BIAS:_ROW_BIAS + 1, 0:4 * H]       # (1, 4H)
        fc_w = p_ref[_ROW_FCW:_ROW_FCW + 1, 0:H]             # (1, H)
        fc_b = p_ref[_ROW_FCB:_ROW_FCB + 1, 0:1]             # (1, 1)

        x = x_ref[...].astype(jnp.float32)                   # (T, Bt, DPAD)

        # Hoisted input projection for every timestep, kept rank-3 so the
        # per-step operand is a free leading-axis index (no sublane-crossing
        # row slices).  Batched (over T) dot_general against a broadcast W_ih
        # keeps both operands in the batched form Mosaic lowers natively.
        w_ih_b = jnp.broadcast_to(w_ih, (T, DPAD, 4 * H))
        gx = jax.lax.dot_general(
            x, w_ih_b,
            dimension_numbers=(((2,), (1,)), ((0,), (0,))),
            preferred_element_type=jnp.float32) + bias        # (T, Bt, 4H)

        h = jnp.zeros((Bt, H), jnp.float32)
        c = jnp.zeros((Bt, H), jnp.float32)

        # Fully unrolled recurrence (T static & small): only h @ W_hh sits on
        # the serial critical path; one full-vreg sigmoid per step.
        for t in range(T):
            gates = gx[t] + jnp.dot(h, w_hh,
                                    preferred_element_type=jnp.float32)  # (Bt,4H)
            act = jax.nn.sigmoid(gates)
            # PyTorch gate order along lanes: [i | f | g | o].
            i = act[:, 0:H]
            f = act[:, H:2 * H]
            g = 2.0 * act[:, 2 * H:3 * H] - 1.0   # tanh(z) = 2*sigmoid(2z) - 1
            o = act[:, 3 * H:4 * H]
            c = f * c + i * g
            h = o * jnp.tanh(c)

        # Dropout(p=0.35) is identity in eval/inference mode.
        # TODO(synk): training-mode dropout (random mask + 1/(1-p)) not implemented.

        # Final 16 -> 1 projection, produced lane-dense as (1, Bt):
        # fc_w (1, H) contracted against h (Bt, H) on H.
        y = jax.lax.dot_general(
            fc_w, h, dimension_numbers=(((1,), (1,)), ((), ())),
            preferred_element_type=jnp.float32) + fc_b        # (1, Bt)
        out_ref[...] = y.reshape(1, 1, Bt).astype(out_ref.dtype)

    return kernel


def _pack_params(params, D, H):
    """Pack all (tiny) parameters into one (32, 128) f32 VMEM tile."""
    w_ih, w_hh, b_ih, b_hh, fc_w, fc_b = params
    assert D <= DPAD and H <= 16, "packed-parameter layout assumes D<=8, H<=16"

    # Pre-scale the g-gate (cell) pre-activations by 2 (single-sigmoid trick).
    gate_scale = jnp.concatenate([
        jnp.ones((2 * H,), jnp.float32),
        jnp.full((H,), 2.0, jnp.float32),
        jnp.ones((H,), jnp.float32)])
    w_ih_t = (w_ih.astype(jnp.float32) * gate_scale[:, None]).T   # (D, 4H)
    w_hh_t = (w_hh.astype(jnp.float32) * gate_scale[:, None]).T   # (H, 4H)
    b = (b_ih + b_hh).astype(jnp.float32) * gate_scale            # (4H,)

    p = jnp.zeros((32, 128), jnp.float32)
    p = p.at[_ROW_WIH:_ROW_WIH + D, 0:4 * H].set(w_ih_t)          # rows D..7 stay 0
    p = p.at[_ROW_WHH:_ROW_WHH + H, 0:4 * H].set(w_hh_t)
    p = p.at[_ROW_BIAS, 0:4 * H].set(b)
    p = p.at[_ROW_FCW, 0:H].set(fc_w.reshape(H).astype(jnp.float32))
    p = p.at[_ROW_FCB, 0].set(fc_b.reshape(()).astype(jnp.float32))
    return p


def _pick_b_tile(B, T):
    """Batch tile: multiple of 8 when possible, >= 2 grid steps when B >= 16
    (v7x has 2 TensorCores sharded by the parallel grid axis), capped so the
    per-tile x + gx slabs stay far below every generation's VMEM."""
    if B < 16:
        return B
    bytes_per_row = 4 * (2 * DPAD + 4 * HIDDEN) * T   # x (double-buffered) + gx, f32
    cap = max(8, min(1024, (4 * 1024 * 1024) // max(1, bytes_per_row)))
    cap = (cap // 8) * 8
    d = min(cap, (B // 2) // 8 * 8)
    while d >= 8:
        if B % d == 0:
            return d
        d -= 8
    return B   # no 8-aligned divisor: single full-batch tile (block == full dim)


@jax.jit
def naive_lstm_forward(x, params):
    """x: (B, T, D) float32, batch_first (same as the PyTorch module).

    Returns fc(dropout(lstm(x)[:, -1, :])).squeeze() -> shape (B,) ((), if B==1).
    """
    B, T, D = x.shape
    H = params[1].shape[1]
    assert D == params[0].shape[1]

    # Time-major, feature dim zero-padded to the sublane quantum.
    x_tm = jnp.transpose(x, (1, 0, 2)).astype(jnp.float32)        # (T, B, D)
    x_tm = jnp.pad(x_tm, ((0, 0), (0, 0), (0, DPAD - D)))          # (T, B, DPAD)
    packed = _pack_params(params, D, H)

    b_tile = _pick_b_tile(B, T)
    n_tiles = B // b_tile

    out = pl.pallas_call(
        _make_lstm_kernel(T, b_tile, H),
        out_shape=jax.ShapeDtypeStruct((n_tiles, 1, b_tile), jnp.float32),
        grid=(n_tiles,),
        in_specs=[
            pl.BlockSpec((T, b_tile, DPAD), lambda i: (0, i, 0)),
            pl.BlockSpec((32, 128), lambda i: (0, 0)),
        ],
        out_specs=pl.BlockSpec((1, 1, b_tile), lambda i: (i, 0, 0)),
        compiler_params=pltpu.CompilerParams(
            dimension_semantics=("parallel",),
            vmem_limit_bytes=32 * 1024 * 1024),
    )(x_tm, packed)

    # torch .squeeze(): (B, 1) -> (B,) for B > 1, -> () for B == 1.
    return jnp.squeeze(out.reshape(B))


def init_params(key, input_dim=INPUT_DIM, hidden=HIDDEN):
    """Deterministic init mirroring PyTorch default uniform(-1/sqrt(H), 1/sqrt(H))."""
    ks = jax.random.split(key, 6)
    k_lstm = 1.0 / jnp.sqrt(hidden)
    k_fc = 1.0 / jnp.sqrt(hidden)
    w_ih = jax.random.uniform(ks[0], (4 * hidden, input_dim), jnp.float32, -k_lstm, k_lstm)
    w_hh = jax.random.uniform(ks[1], (4 * hidden, hidden), jnp.float32, -k_lstm, k_lstm)
    b_ih = jax.random.uniform(ks[2], (4 * hidden,), jnp.float32, -k_lstm, k_lstm)
    b_hh = jax.random.uniform(ks[3], (4 * hidden,), jnp.float32, -k_lstm, k_lstm)
    fc_w = jax.random.uniform(ks[4], (1, hidden), jnp.float32, -k_fc, k_fc)
    fc_b = jax.random.uniform(ks[5], (1,), jnp.float32, -k_fc, k_fc)
    return (w_ih, w_hh, b_ih, b_hh, fc_w, fc_b)


def _lstm_reference(x, params):
    """Pure-JAX reference mirroring the PyTorch module in eval mode."""
    w_ih, w_hh, b_ih, b_hh, fc_w, fc_b = params
    B, T, D = x.shape
    H = w_hh.shape[1]
    h = jnp.zeros((B, H), jnp.float32)
    c = jnp.zeros((B, H), jnp.float32)
    for t in range(T):
        gates = x[:, t, :] @ w_ih.T + h @ w_hh.T + b_ih + b_hh
        i = jax.nn.sigmoid(gates[:, 0:H])
        f = jax.nn.sigmoid(gates[:, H:2 * H])
        g = jnp.tanh(gates[:, 2 * H:3 * H])
        o = jax.nn.sigmoid(gates[:, 3 * H:4 * H])
        c = f * c + i * g
        h = o * jnp.tanh(c)
    return jnp.squeeze(h @ fc_w.T + fc_b)


if __name__ == "__main__":
    key = jax.random.PRNGKey(0)
    k_param, k_x = jax.random.split(key)

    B, T, D = 2, 8, INPUT_DIM
    params = init_params(k_param)
    x = jax.random.normal(k_x, (B, T, D), jnp.float32)

    y = jax.block_until_ready(naive_lstm_forward(x, params))
    assert y.shape == (B,), y.shape

    y_ref = _lstm_reference(x, params)
    assert jnp.allclose(y, y_ref, rtol=1e-5, atol=1e-5), (y, y_ref)

    print("KERNEL_OK")
</pallas_src>

<mosaic_0001>
module attributes {stable_mosaic.version = 11 : i64} {
  func.func @kernel(%arg0: i32, %arg1: memref<8x2x8xf32, #tpu.memory_space<vmem>>, %arg2: memref<32x128xf32, #tpu.memory_space<vmem>>, %arg3: memref<1x1x2xf32, #tpu.memory_space<vmem>>) attributes {dimension_semantics = [#tpu.dimension_semantics<parallel>], iteration_bounds = array<i64: 1>, scalar_prefetch = 0 : i64, scratch_operands = 0 : i64, tpu.core_type = #tpu.core_type<tc>, window_params = [{transform_indices = @transform_0, window_bounds = array<i64: 8, 2, 8>}, {pipeline_mode = #tpu.pipeline_mode<synchronous>, transform_indices = @transform_1, window_bounds = array<i64: 32, 128>}, {transform_indices = @transform_2, window_bounds = array<i64: 1, 1, 2>}]} {
    %c0 = arith.constant 0 : index
    %c0_0 = arith.constant 0 : index
    %0 = vector.load %arg2[%c0, %c0_0] : memref<32x128xf32, #tpu.memory_space<vmem>>, vector<8x64xf32>
    %c8 = arith.constant 8 : index
    %c0_1 = arith.constant 0 : index
    %1 = vector.load %arg2[%c8, %c0_1] : memref<32x128xf32, #tpu.memory_space<vmem>>, vector<16x64xf32>
    %c24 = arith.constant 24 : index
    %c0_2 = arith.constant 0 : index
    %2 = vector.load %arg2[%c24, %c0_2] : memref<32x128xf32, #tpu.memory_space<vmem>>, vector<1x64xf32>
    %c25 = arith.constant 25 : index
    %c0_3 = arith.constant 0 : index
    %3 = vector.load %arg2[%c25, %c0_3] : memref<32x128xf32, #tpu.memory_space<vmem>>, vector<1x16xf32>
    %c26 = arith.constant 26 : index
    %c0_4 = arith.constant 0 : index
    %4 = vector.load %arg2[%c26, %c0_4] : memref<32x128xf32, #tpu.memory_space<vmem>>, vector<1x1xf32>
    %c0_5 = arith.constant 0 : index
    %c0_6 = arith.constant 0 : index
    %c0_7 = arith.constant 0 : index
    %5 = vector.load %arg1[%c0_5, %c0_6, %c0_7] : memref<8x2x8xf32, #tpu.memory_space<vmem>>, vector<8x2x8xf32>
    %6 = vector.shape_cast %0 : vector<8x64xf32> to vector<1x8x64xf32>
    %7 = vector.broadcast %6 : vector<1x8x64xf32> to vector<8x8x64xf32>
    %cst = arith.constant dense<0.000000e+00> : vector<8x2x64xf32>
    %8 = tpu.matmul %5, %7, %cst {dimension_numbers = #tpu.dot_dimension_numbers<[2], [1], [1], [2], [0, 0, 0, 1, 1, 2], [0], [0]>} : vector<8x2x8xf32>, vector<8x8x64xf32>, vector<8x2x64xf32> -> vector<8x2x64xf32>
    %9 = vector.shape_cast %2 : vector<1x64xf32> to vector<1x1x64xf32>
    %10 = vector.broadcast %9 : vector<1x1x64xf32> to vector<8x2x64xf32>
    %11 = arith.addf %8, %10 : vector<8x2x64xf32>
    %cst_8 = arith.constant 0.000000e+00 : f32
    %12 = vector.broadcast %cst_8 : f32 to vector<2x16xf32>
    %cst_9 = arith.constant 0.000000e+00 : f32
    %13 = vector.broadcast %cst_9 : f32 to vector<2x16xf32>
    %14 = vector.extract_strided_slice %11 {offsets = [0, 0, 0], sizes = [1, 2, 64], strides = [1, 1, 1]} : vector<8x2x64xf32> to vector<1x2x64xf32>
    %15 = vector.shape_cast %14 : vector<1x2x64xf32> to vector<2x64xf32>
    %cst_10 = arith.constant dense<0.000000e+00> : vector<2x64xf32>
    %16 = tpu.matmul %12, %1, %cst_10 {dimension_numbers = #tpu.dot_dimension_numbers<[1], [0], [0], [1], [0, 0, 1, 1], [], []>} : vector<2x16xf32>, vector<16x64xf32>, vector<2x64xf32> -> vector<2x64xf32>
    %17 = arith.addf %15, %16 : vector<2x64xf32>
    %18 = arith.negf %17 : vector<2x64xf32>
    %19 = math.exp %18 : vector<2x64xf32>
    %cst_11 = arith.constant 1.000000e+00 : f32
    %20 = vector.broadcast %cst_11 : f32 to vector<2x64xf32>
    %21 = arith.addf %20, %19 : vector<2x64xf32>
    %22 = arith.divf %20, %21 : vector<2x64xf32>
    %23 = vector.extract_strided_slice %22 {offsets = [0, 0], sizes = [2, 16], strides = [1, 1]} : vector<2x64xf32> to vector<2x16xf32>
    %24 = vector.extract_strided_slice %22 {offsets = [0, 16], sizes = [2, 16], strides = [1, 1]} : vector<2x64xf32> to vector<2x16xf32>
    %25 = vector.extract_strided_slice %22 {offsets = [0, 32], sizes = [2, 16], strides = [1, 1]} : vector<2x64xf32> to vector<2x16xf32>
    %cst_12 = arith.constant 2.000000e+00 : f32
    %26 = vector.broadcast %cst_12 : f32 to vector<2x16xf32>
    %27 = arith.mulf %26, %25 : vector<2x16xf32>
    %cst_13 = arith.constant 1.000000e+00 : f32
    %28 = vector.broadcast %cst_13 : f32 to vector<2x16xf32>
    %29 = arith.subf %27, %28 : vector<2x16xf32>
    %30 = vector.extract_strided_slice %22 {offsets = [0, 48], sizes = [2, 16], strides = [1, 1]} : vector<2x64xf32> to vector<2x16xf32>
    %31 = arith.mulf %24, %13 : vector<2x16xf32>
    %32 = arith.mulf %23, %29 : vector<2x16xf32>
    %33 = arith.addf %31, %32 : vector<2x16xf32>
    %34 = math.tanh %33 : vector<2x16xf32>
    %35 = arith.mulf %30, %34 : vector<2x16xf32>
    %36 = vector.extract_strided_slice %11 {offsets = [1, 0, 0], sizes = [1, 2, 64], strides = [1, 1, 1]} : vector<8x2x64xf32> to vector<1x2x64xf32>
    %37 = vector.shape_cast %36 : vector<1x2x64xf32> to vector<2x64xf32>
    %cst_14 = arith.constant dense<0.000000e+00> : vector<2x64xf32>
    %38 = tpu.matmul %35, %1, %cst_14 {dimension_numbers = #tpu.dot_dimension_numbers<[1], [0], [0], [1], [0, 0, 1, 1], [], []>} : vector<2x16xf32>, vector<16x64xf32>, vector<2x64xf32> -> vector<2x64xf32>
    %39 = arith.addf %37, %38 : vector<2x64xf32>
    %40 = arith.negf %39 : vector<2x64xf32>
    %41 = math.exp %40 : vector<2x64xf32>
    %cst_15 = arith.constant 1.000000e+00 : f32
    %42 = vector.broadcast %cst_15 : f32 to vector<2x64xf32>
    %43 = arith.addf %42, %41 : vector<2x64xf32>
    %44 = arith.divf %42, %43 : vector<2x64xf32>
    %45 = vector.extract_strided_slice %44 {offsets = [0, 0], sizes = [2, 16], strides = [1, 1]} : vector<2x64xf32> to vector<2x16xf32>
    %46 = vector.extract_strided_slice %44 {offsets = [0, 16], sizes = [2, 16], strides = [1, 1]} : vector<2x64xf32> to vector<2x16xf32>
    %47 = vector.extract_strided_slice %44 {offsets = [0, 32], sizes = [2, 16], strides = [1, 1]} : vector<2x64xf32> to vector<2x16xf32>
    %cst_16 = arith.constant 2.000000e+00 : f32
    %48 = vector.broadcast %cst_16 : f32 to vector<2x16xf32>
    %49 = arith.mulf %48, %47 : vector<2x16xf32>
    %cst_17 = arith.constant 1.000000e+00 : f32
    %50 = vector.broadcast %cst_17 : f32 to vector<2x16xf32>
    %51 = arith.subf %49, %50 : vector<2x16xf32>
    %52 = vector.extract_strided_slice %44 {offsets = [0, 48], sizes = [2, 16], strides = [1, 1]} : vector<2x64xf32> to vector<2x16xf32>
    %53 = arith.mulf %46, %33 : vector<2x16xf32>
    %54 = arith.mulf %45, %51 : vector<2x16xf32>
    %55 = arith.addf %53, %54 : vector<2x16xf32>
    %56 = math.tanh %55 : vector<2x16xf32>
    %57 = arith.mulf %52, %56 : vector<2x16xf32>
    %58 = vector.extract_strided_slice %11 {offsets = [2, 0, 0], sizes = [1, 2, 64], strides = [1, 1, 1]} : vector<8x2x64xf32> to vector<1x2x64xf32>
    %59 = vector.shape_cast %58 : vector<1x2x64xf32> to vector<2x64xf32>
    %cst_18 = arith.constant dense<0.000000e+00> : vector<2x64xf32>
    %60 = tpu.matmul %57, %1, %cst_18 {dimension_numbers = #tpu.dot_dimension_numbers<[1], [0], [0], [1], [0, 0, 1, 1], [], []>} : vector<2x16xf32>, vector<16x64xf32>, vector<2x64xf32> -> vector<2x64xf32>
    %61 = arith.addf %59, %60 : vector<2x64xf32>
    %62 = arith.negf %61 : vector<2x64xf32>
    %63 = math.exp %62 : vector<2x64xf32>
    %cst_19 = arith.constant 1.000000e+00 : f32
    %64 = vector.broadcast %cst_19 : f32 to vector<2x64xf32>
    %65 = arith.addf %64, %63 : vector<2x64xf32>
    %66 = arith.divf %64, %65 : vector<2x64xf32>
    %67 = vector.extract_strided_slice %66 {offsets = [0, 0], sizes = [2, 16], strides = [1, 1]} : vector<2x64xf32> to vector<2x16xf32>
    %68 = vector.extract_strided_slice %66 {offsets = [0, 16], sizes = [2, 16], strides = [1, 1]} : vector<2x64xf32> to vector<2x16xf32>
    %69 = vector.extract_strided_slice %66 {offsets = [0, 32], sizes = [2, 16], strides = [1, 1]} : vector<2x64xf32> to vector<2x16xf32>
    %cst_20 = arith.constant 2.000000e+00 : f32
    %70 = vector.broadcast %cst_20 : f32 to vector<2x16xf32>
    %71 = arith.mulf %70, %69 : vector<2x16xf32>
    %cst_21 = arith.constant 1.000000e+00 : f32
    %72 = vector.broadcast %cst_21 : f32 to vector<2x16xf32>
    %73 = arith.subf %71, %72 : vector<2x16xf32>
    %74 = vector.extract_strided_slice %66 {offsets = [0, 48], sizes = [2, 16], strides = [1, 1]} : vector<2x64xf32> to vector<2x16xf32>
    %75 = arith.mulf %68, %55 : vector<2x16xf32>
    %76 = arith.mulf %67, %73 : vector<2x16xf32>
    %77 = arith.addf %75, %76 : vector<2x16xf32>
    %78 = math.tanh %77 : vector<2x16xf32>
    %79 = arith.mulf %74, %78 : vector<2x16xf32>
    %80 = vector.extract_strided_slice %11 {offsets = [3, 0, 0], sizes = [1, 2, 64], strides = [1, 1, 1]} : vector<8x2x64xf32> to vector<1x2x64xf32>
    %81 = vector.shape_cast %80 : vector<1x2x64xf32> to vector<2x64xf32>
    %cst_22 = arith.constant dense<0.000000e+00> : vector<2x64xf32>
    %82 = tpu.matmul %79, %1, %cst_22 {dimension_numbers = #tpu.dot_dimension_numbers<[1], [0], [0], [1], [0, 0, 1, 1], [], []>} : vector<2x16xf32>, vector<16x64xf32>, vector<2x64xf32> -> vector<2x64xf32>
    %83 = arith.addf %81, %82 : vector<2x64xf32>
    %84 = arith.negf %83 : vector<2x64xf32>
    %85 = math.exp %84 : vector<2x64xf32>
    %cst_23 = arith.constant 1.000000e+00 : f32
    %86 = vector.broadcast %cst_23 : f32 to vector<2x64xf32>
    %87 = arith.addf %86, %85 : vector<2x64xf32>
    %88 = arith.divf %86, %87 : vector<2x64xf32>
    %89 = vector.extract_strided_slice %88 {offsets = [0, 0], sizes = [2, 16], strides = [1, 1]} : vector<2x64xf32> to vector<2x16xf32>
    %90 = vector.extract_strided_slice %88 {offsets = [0, 16], sizes = [2, 16], strides = [1, 1]} : vector<2x64xf32> to vector<2x16xf32>
    %91 = vector.extract_strided_slice %88 {offsets = [0, 32], sizes = [2, 16], strides = [1, 1]} : vector<2x64xf32> to vector<2x16xf32>
    %cst_24 = arith.constant 2.000000e+00 : f32
    %92 = vector.broadcast %cst_24 : f32 to vector<2x16xf32>
    %93 = arith.mulf %92, %91 : vector<2x16xf32>
    %cst_25 = arith.constant 1.000000e+00 : f32
    %94 = vector.broadcast %cst_25 : f32 to vector<2x16xf32>
    %95 = arith.subf %93, %94 : vector<2x16xf32>
    %96 = vector.extract_strided_slice %88 {offsets = [0, 48], sizes = [2, 16], strides = [1, 1]} : vector<2x64xf32> to vector<2x16xf32>
    %97 = arith.mulf %90, %77 : vector<2x16xf32>
    %98 = arith.mulf %89, %95 : vector<2x16xf32>
    %99 = arith.addf %97, %98 : vector<2x16xf32>
    %100 = math.tanh %99 : vector<2x16xf32>
    %101 = arith.mulf %96, %100 : vector<2x16xf32>
    %102 = vector.extract_strided_slice %11 {offsets = [4, 0, 0], sizes = [1, 2, 64], strides = [1, 1, 1]} : vector<8x2x64xf32> to vector<1x2x64xf32>
    %103 = vector.shape_cast %102 : vector<1x2x64xf32> to vector<2x64xf32>
    %cst_26 = arith.constant dense<0.000000e+00> : vector<2x64xf32>
    %104 = tpu.matmul %101, %1, %cst_26 {dimension_numbers = #tpu.dot_dimension_numbers<[1], [0], [0], [1], [0, 0, 1, 1], [], []>} : vector<2x16xf32>, vector<16x64xf32>, vector<2x64xf32> -> vector<2x64xf32>
    %105 = arith.addf %103, %104 : vector<2x64xf32>
    %106 = arith.negf %105 : vector<2x64xf32>
    %107 = math.exp %106 : vector<2x64xf32>
    %cst_27 = arith.constant 1.000000e+00 : f32
    %108 = vector.broadcast %cst_27 : f32 to vector<2x64xf32>
    %109 = arith.addf %108, %107 : vector<2x64xf32>
    %110 = arith.divf %108, %109 : vector<2x64xf32>
    %111 = vector.extract_strided_slice %110 {offsets = [0, 0], sizes = [2, 16], strides = [1, 1]} : vector<2x64xf32> to vector<2x16xf32>
    %112 = vector.extract_strided_slice %110 {offsets = [0, 16], sizes = [2, 16], strides = [1, 1]} : vector<2x64xf32> to vector<2x16xf32>
    %113 = vector.extract_strided_slice %110 {offsets = [0, 32], sizes = [2, 16], strides = [1, 1]} : vector<2x64xf32> to vector<2x16xf32>
    %cst_28 = arith.constant 2.000000e+00 : f32
    %114 = vector.broadcast %cst_28 : f32 to vector<2x16xf32>
    %115 = arith.mulf %114, %113 : vector<2x16xf32>
    %cst_29 = arith.constant 1.000000e+00 : f32
    %116 = vector.broadcast %cst_29 : f32 to vector<2x16xf32>
    %117 = arith.subf %115, %116 : vector<2x16xf32>
    %118 = vector.extract_strided_slice %110 {offsets = [0, 48], sizes = [2, 16], strides = [1, 1]} : vector<2x64xf32> to vector<2x16xf32>
    %119 = arith.mulf %112, %99 : vector<2x16xf32>
    %120 = arith.mulf %111, %117 : vector<2x16xf32>
    %121 = arith.addf %119, %120 : vector<2x16xf32>
    %122 = math.tanh %121 : vector<2x16xf32>
    %123 = arith.mulf %118, %122 : vector<2x16xf32>
    %124 = vector.extract_strided_slice %11 {offsets = [5, 0, 0], sizes = [1, 2, 64], strides = [1, 1, 1]} : vector<8x2x64xf32> to vector<1x2x64xf32>
    %125 = vector.shape_cast %124 : vector<1x2x64xf32> to vector<2x64xf32>
    %cst_30 = arith.constant dense<0.000000e+00> : vector<2x64xf32>
    %126 = tpu.matmul %123, %1, %cst_30 {dimension_numbers = #tpu.dot_dimension_numbers<[1], [0], [0], [1], [0, 0, 1, 1], [], []>} : vector<2x16xf32>, vector<16x64xf32>, vector<2x64xf32> -> vector<2x64xf32>
    %127 = arith.addf %125, %126 : vector<2x64xf32>
    %128 = arith.negf %127 : vector<2x64xf32>
    %129 = math.exp %128 : vector<2x64xf32>
    %cst_31 = arith.constant 1.000000e+00 : f32
    %130 = vector.broadcast %cst_31 : f32 to vector<2x64xf32>
    %131 = arith.addf %130, %129 : vector<2x64xf32>
    %132 = arith.divf %130, %131 : vector<2x64xf32>
    %133 = vector.extract_strided_slice %132 {offsets = [0, 0], sizes = [2, 16], strides = [1, 1]} : vector<2x64xf32> to vector<2x16xf32>
    %134 = vector.extract_strided_slice %132 {offsets = [0, 16], sizes = [2, 16], strides = [1, 1]} : vector<2x64xf32> to vector<2x16xf32>
    %135 = vector.extract_strided_slice %132 {offsets = [0, 32], sizes = [2, 16], strides = [1, 1]} : vector<2x64xf32> to vector<2x16xf32>
    %cst_32 = arith.constant 2.000000e+00 : f32
    %136 = vector.broadcast %cst_32 : f32 to vector<2x16xf32>
    %137 = arith.mulf %136, %135 : vector<2x16xf32>
    %cst_33 = arith.constant 1.000000e+00 : f32
    %138 = vector.broadcast %cst_33 : f32 to vector<2x16xf32>
    %139 = arith.subf %137, %138 : vector<2x16xf32>
    %140 = vector.extract_strided_slice %132 {offsets = [0, 48], sizes = [2, 16], strides = [1, 1]} : vector<2x64xf32> to vector<2x16xf32>
    %141 = arith.mulf %134, %121 : vector<2x16xf32>
    %142 = arith.mulf %133, %139 : vector<2x16xf32>
    %143 = arith.addf %141, %142 : vector<2x16xf32>
    %144 = math.tanh %143 : vector<2x16xf32>
    %145 = arith.mulf %140, %144 : vector<2x16xf32>
    %146 = vector.extract_strided_slice %11 {offsets = [6, 0, 0], sizes = [1, 2, 64], strides = [1, 1, 1]} : vector<8x2x64xf32> to vector<1x2x64xf32>
    %147 = vector.shape_cast %146 : vector<1x2x64xf32> to vector<2x64xf32>
    %cst_34 = arith.constant dense<0.000000e+00> : vector<2x64xf32>
    %148 = tpu.matmul %145, %1, %cst_34 {dimension_numbers = #tpu.dot_dimension_numbers<[1], [0], [0], [1], [0, 0, 1, 1], [], []>} : vector<2x16xf32>, vector<16x64xf32>, vector<2x64xf32> -> vector<2x64xf32>
    %149 = arith.addf %147, %148 : vector<2x64xf32>
    %150 = arith.negf %149 : vector<2x64xf32>
    %151 = math.exp %150 : vector<2x64xf32>
    %cst_35 = arith.constant 1.000000e+00 : f32
    %152 = vector.broadcast %cst_35 : f32 to vector<2x64xf32>
    %153 = arith.addf %152, %151 : vector<2x64xf32>
    %154 = arith.divf %152, %153 : vector<2x64xf32>
    %155 = vector.extract_strided_slice %154 {offsets = [0, 0], sizes = [2, 16], strides = [1, 1]} : vector<2x64xf32> to vector<2x16xf32>
    %156 = vector.extract_strided_slice %154 {offsets = [0, 16], sizes = [2, 16], strides = [1, 1]} : vector<2x64xf32> to vector<2x16xf32>
    %157 = vector.extract_strided_slice %154 {offsets = [0, 32], sizes = [2, 16], strides = [1, 1]} : vector<2x64xf32> to vector<2x16xf32>
    %cst_36 = arith.constant 2.000000e+00 : f32
    %158 = vector.broadcast %cst_36 : f32 to vector<2x16xf32>
    %159 = arith.mulf %158, %157 : vector<2x16xf32>
    %cst_37 = arith.constant 1.000000e+00 : f32
    %160 = vector.broadcast %cst_37 : f32 to vector<2x16xf32>
    %161 = arith.subf %159, %160 : vector<2x16xf32>
    %162 = vector.extract_strided_slice %154 {offsets = [0, 48], sizes = [2, 16], strides = [1, 1]} : vector<2x64xf32> to vector<2x16xf32>
    %163 = arith.mulf %156, %143 : vector<2x16xf32>
    %164 = arith.mulf %155, %161 : vector<2x16xf32>
    %165 = arith.addf %163, %164 : vector<2x16xf32>
    %166 = math.tanh %165 : vector<2x16xf32>
    %167 = arith.mulf %162, %166 : vector<2x16xf32>
    %168 = vector.extract_strided_slice %11 {offsets = [7, 0, 0], sizes = [1, 2, 64], strides = [1, 1, 1]} : vector<8x2x64xf32> to vector<1x2x64xf32>
    %169 = vector.shape_cast %168 : vector<1x2x64xf32> to vector<2x64xf32>
    %cst_38 = arith.constant dense<0.000000e+00> : vector<2x64xf32>
    %170 = tpu.matmul %167, %1, %cst_38 {dimension_numbers = #tpu.dot_dimension_numbers<[1], [0], [0], [1], [0, 0, 1, 1], [], []>} : vector<2x16xf32>, vector<16x64xf32>, vector<2x64xf32> -> vector<2x64xf32>
    %171 = arith.addf %169, %170 : vector<2x64xf32>
    %172 = arith.negf %171 : vector<2x64xf32>
    %173 = math.exp %172 : vector<2x64xf32>
    %cst_39 = arith.constant 1.000000e+00 : f32
    %174 = vector.broadcast %cst_39 : f32 to vector<2x64xf32>
    %175 = arith.addf %174, %173 : vector<2x64xf32>
    %176 = arith.divf %174, %175 : vector<2x64xf32>
    %177 = vector.extract_strided_slice %176 {offsets = [0, 0], sizes = [2, 16], strides = [1, 1]} : vector<2x64xf32> to vector<2x16xf32>
    %178 = vector.extract_strided_slice %176 {offsets = [0, 16], sizes = [2, 16], strides = [1, 1]} : vector<2x64xf32> to vector<2x16xf32>
    %179 = vector.extract_strided_slice %176 {offsets = [0, 32], sizes = [2, 16], strides = [1, 1]} : vector<2x64xf32> to vector<2x16xf32>
    %cst_40 = arith.constant 2.000000e+00 : f32
    %180 = vector.broadcast %cst_40 : f32 to vector<2x16xf32>
    %181 = arith.mulf %180, %179 : vector<2x16xf32>
    %cst_41 = arith.constant 1.000000e+00 : f32
    %182 = vector.broadcast %cst_41 : f32 to vector<2x16xf32>
    %183 = arith.subf %181, %182 : vector<2x16xf32>
    %184 = vector.extract_strided_slice %176 {offsets = [0, 48], sizes = [2, 16], strides = [1, 1]} : vector<2x64xf32> to vector<2x16xf32>
    %185 = arith.mulf %178, %165 : vector<2x16xf32>
    %186 = arith.mulf %177, %183 : vector<2x16xf32>
    %187 = arith.addf %185, %186 : vector<2x16xf32>
    %188 = math.tanh %187 : vector<2x16xf32>
    %189 = arith.mulf %184, %188 : vector<2x16xf32>
    %cst_42 = arith.constant dense<0.000000e+00> : vector<1x2xf32>
    %190 = tpu.matmul %3, %189, %cst_42 {dimension_numbers = #tpu.dot_dimension_numbers<[1], [1], [0], [0], [0, 0, 1, 0], [], []>} : vector<1x16xf32>, vector<2x16xf32>, vector<1x2xf32> -> vector<1x2xf32>
    %191 = vector.broadcast %4 : vector<1x1xf32> to vector<1x2xf32>
    %192 = arith.addf %190, %191 : vector<1x2xf32>
    %193 = vector.shape_cast %192 : vector<1x2xf32> to vector<1x1x2xf32>
    %c0_43 = arith.constant 0 : index
    %c0_44 = arith.constant 0 : index
    %c0_45 = arith.constant 0 : index
    %194 = vector.load %arg3[%c0_43, %c0_44, %c0_45] : memref<1x1x2xf32, #tpu.memory_space<vmem>>, vector<1x1x2xf32>
    tpu.vector_store %arg3[%c0_43, %c0_44, %c0_45], %193 {strides = array<i32>} : memref<1x1x2xf32, #tpu.memory_space<vmem>>, vector<1x1x2xf32>,
    return
  }
  func.func @transform_0(%arg0: i32) -> (i32, i32, i32) {
    %c0_i32 = arith.constant 0 : i32
    %c0_i32_0 = arith.constant 0 : i32
    %c0_i32_1 = arith.constant 0 : i32
    return %c0_i32, %arg0, %c0_i32_0 : i32, i32, i32
  }
  func.func @transform_1(%arg0: i32) -> (i32, i32) {
    %c0_i32 = arith.constant 0 : i32
    %c0_i32_0 = arith.constant 0 : i32
    %c0_i32_1 = arith.constant 0 : i32
    return %c0_i32, %c0_i32_0 : i32, i32
  }
  func.func @transform_2(%arg0: i32) -> (i32, i32, i32) {
    %c0_i32 = arith.constant 0 : i32
    %c0_i32_0 = arith.constant 0 : i32
    %c0_i32_1 = arith.constant 0 : i32
    return %arg0, %c0_i32, %c0_i32_0 : i32, i32, i32
  }
}

</mosaic_0001>

<llo_original>
// kernel: naive_lstm_forward.1
$region0: #{naive_lstm_forward.1}
  #allocation0 [shape = 'u32[]', space=smem, size = 0x4, offset = 0x4, fixed_abs, tag = 'smem constant byte address 0x4 - core index']
  #allocation1 [shape = 'u32[144,128]{1,0:T(1,128)}', space=vmem, size = 0x12000, scoped, tag = 'internal scratch']
  %s0 = inlined_call_operand.vmem [shape: f32[8,2,8], index: 0, kind: input, shape index: {}]
  %s1 = inlined_call_operand.vmem [shape: f32[32,128], index: 1, kind: input, shape index: {}]
  %s2 = inlined_call_operand.hbm [shape: f32[1,1,2], index: 2, kind: output, shape index: {}]
  %s3 = sld [smem:[#allocation0]]
  $region18: #{naive_lstm_forward.1} parent=0
    _
  %s5 = ssub.s32 1, %s3
  %s6 = scalar_select 0, %s5, %s3
  $region1: #{naive_lstm_forward.1} parent=0
    #allocation2 [shape = 'u8[512]{0}', space=vmem, size = 0x400, scoped, tag = 'output window, operand 0, single buffered']
    #allocation3 [shape = 's32[1]{0}', space=sflag, size = 0x4, scoped, tag = 'scoped memory for naive_lstm_forward.1']
    %7 = vsyncpa [#allocation3], 0
    // Predicated region
    $region2: #{naive_lstm_forward.1} parent=1 // pred_check
      _
    $region3: #{naive_lstm_forward.1} parent=1 // pred_check_branch
      %9 = sbr.rel (0) target = $region5
    $region4: #{naive_lstm_forward.1} parent=1 // pred_region
      _
    $region5: #{naive_lstm_forward.1} parent=1 // pred_fallthru
      _
    // Predicated region
    $region6: #{naive_lstm_forward.1} parent=1 // pred_check
      _
    $region7: #{naive_lstm_forward.1} parent=1 // pred_check_branch
      %11 = sbr.rel (0) target = $region9
    $region8: #{naive_lstm_forward.1} parent=1 // pred_region
      _
    $region9: #{naive_lstm_forward.1} parent=1 // pred_fallthru
      _
    %v12 = vld [vmem:[%s1] sm:$0xff]
    %v13 = vld [vmem:[%s1 + $0x8] sm:$0xff]
    %v14 = vld [vmem:[%s1 + $0x10] sm:$0xff]
    %v15 = vld [vmem:[%s1 + $0x18] sm:$0x1]
    %v16 = vld [vmem:[%s1 + $0x19] sm:$0x1]
    %v17 = vld [vmem:[%s1 + $0x1a] sm:$0x1]
    %v18 = vld [vmem:[%s0] sm:$0x3]
    %v19 = vld [vmem:[%s0 + $0x2] sm:$0x3]
    %v20 = vld [vmem:[%s0 + $0x4] sm:$0x3]
    %v21 = vld [vmem:[%s0 + $0x6] sm:$0x3]
    %v22 = vld [vmem:[%s0 + $0x8] sm:$0x3]
    %v23 = vld [vmem:[%s0 + $0xa] sm:$0x3]
    %v24 = vld [vmem:[%s0 + $0xc] sm:$0x3]
    %v25 = vld [vmem:[%s0 + $0xe] sm:$0x3]
    %v26 = vlaneseq
    %v27 = vshrl.u32 %v26, 7
    %v28 = vsub.s32 0, %v27
    %v29 = vrot.slane %v15, %v28
    %vm30 = vcmask 64512
    %v32 = vsel %vm30, %v18, 0
    %34 = vmatprep.subr.mxu0 0.0
    %35 = vmatpush1.msra.mxu0 %v12
    %36 = vmatprep.subr.mxu0 0.0
    %37 = vmatpush1.msra.mxu0 0.0
    %38 = vmatprep.subr.mxu0 0.0
    %39 = vmatpush1.msra.mxu0 0.0
    %40 = vmatprep.subr.mxu0 0.0
    %41 = vmatpush1.msra.mxu0 0.0
    %42 = vmatprep.subr.mxu0 0.0
    %43 = vmatpush1.msra.mxu0 0.0
    %44 = vmatprep.subr.mxu0 0.0
    %45 = vmatpush1.msra.mxu0 0.0
    %46 = vmatprep.subr.mxu0 0.0
    %47 = vmatpush1.msra.mxu0 0.0
    %48 = vmatprep.subr.mxu0 0.0
    %49 = vmatpush1.msra.mxu0 0.0
    %50 = vmatprep.subr.mxu0 0.0
    %51 = vmatpush1.msra.mxu0 0.0
    %52 = vmatprep.subr.mxu0 0.0
    %53 = vmatpush1.msra.mxu0 0.0
    %54 = vmatprep.subr.mxu0 0.0
    %55 = vmatpush1.msra.mxu0 0.0
    %56 = vmatprep.subr.mxu0 0.0
    %57 = vmatpush1.msra.mxu0 0.0
    %58 = vmatprep.subr.mxu0 0.0
    %59 = vmatpush1.msra.mxu0 0.0
    %60 = vmatprep.subr.mxu0 0.0
    %61 = vmatpush1.msra.mxu0 0.0
    %62 = vmatprep.subr.mxu0 0.0
    %63 = vmatpush1.msra.mxu0 0.0
    %64 = vmatprep.subr.mxu0 0.0
    %65 = vmatpush1.msra.mxu0 0.0
    %66 = vmatprep.subr.mxu0 0.0
    %67 = vmatpush1.msra.mxu0 0.0
    %68 = vmatprep.subr.mxu0 0.0
    %69 = vmatpush1.msra.mxu0 0.0
    %70 = vmatprep.subr.mxu0 0.0
    %71 = vmatpush1.msra.mxu0 0.0
    %72 = vmatprep.subr.mxu0 0.0
    %73 = vmatpush1.msra.mxu0 0.0
    %74 = vmatprep.subr.mxu0 0.0
    %75 = vmatpush1.msra.mxu0 0.0
    %76 = vmatprep.subr.mxu0 0.0
    %77 = vmatpush1.msra.mxu0 0.0
    %78 = vmatprep.subr.mxu0 0.0
    %79 = vmatpush1.msra.mxu0 0.0
    %80 = vmatprep.subr.mxu0 0.0
    %81 = vmatpush1.msra.mxu0 0.0
    %82 = vmatprep.subr.mxu0 0.0
    %83 = vmatpush1.msra.mxu0 0.0
    %84 = vmatprep.subr.mxu0 0.0
    %85 = vmatpush1.msra.mxu0 0.0
    %86 = vmatprep.subr.mxu0 0.0
    %87 = vmatpush1.msra.mxu0 0.0
    %88 = vmatprep.subr.mxu0 0.0
    %89 = vmatpush1.msra.mxu0 0.0
    %90 = vmatprep.subr.mxu0 0.0
    %91 = vmatpush1.msra.mxu0 0.0
    %92 = vmatprep.subr.mxu0 0.0
    %93 = vmatpush1.msra.mxu0 0.0
    %94 = vmatprep.subr.mxu0 0.0
    %95 = vmatpush1.msra.mxu0 0.0
    %96 = vmatprep.subr.mxu0 0.0
    %97 = vmatpush1.msra.mxu0 0.0
    %98 = vmatprep.mubr.f32.mxu0 0.0
    %99 = vmatmul.mubr.f32.gmra.mrb[0].mxu0 %v32
    %v100 = vpop.f32.mrb[0].mxu0
    %v101 = vadd.f32 %v29, %v100
    %v102 = vpop.f32.mrb[0].mxu0
    %103 = vdwg.mxu0
    %v105 = vsel %vm30, %v19, 0
    %107 = vmatprep.subr.mxu0 0.0
    %108 = vmatpush1.msra.mxu0 %v12
    %109 = vmatprep.subr.mxu0 0.0
    %110 = vmatpush1.msra.mxu0 0.0
    %111 = vmatprep.subr.mxu0 0.0
    %112 = vmatpush1.msra.mxu0 0.0
    %113 = vmatprep.subr.mxu0 0.0
    %114 = vmatpush1.msra.mxu0 0.0
    %115 = vmatprep.subr.mxu0 0.0
    %116 = vmatpush1.msra.mxu0 0.0
    %117 = vmatprep.subr.mxu0 0.0
    %118 = vmatpush1.msra.mxu0 0.0
    %119 = vmatprep.subr.mxu0 0.0
    %120 = vmatpush1.msra.mxu0 0.0
    %121 = vmatprep.subr.mxu0 0.0
    %122 = vmatpush1.msra.mxu0 0.0
    %123 = vmatprep.subr.mxu0 0.0
    %124 = vmatpush1.msra.mxu0 0.0
    %125 = vmatprep.subr.mxu0 0.0
    %126 = vmatpush1.msra.mxu0 0.0
    %127 = vmatprep.subr.mxu0 0.0
    %128 = vmatpush1.msra.mxu0 0.0
    %129 = vmatprep.subr.mxu0 0.0
    %130 = vmatpush1.msra.mxu0 0.0
    %131 = vmatprep.subr.mxu0 0.0
    %132 = vmatpush1.msra.mxu0 0.0
    %133 = vmatprep.subr.mxu0 0.0
    %134 = vmatpush1.msra.mxu0 0.0
    %135 = vmatprep.subr.mxu0 0.0
    %136 = vmatpush1.msra.mxu0 0.0
    %137 = vmatprep.subr.mxu0 0.0
    %138 = vmatpush1.msra.mxu0 0.0
    %139 = vmatprep.subr.mxu0 0.0
    %140 = vmatpush1.msra.mxu0 0.0
    %141 = vmatprep.subr.mxu0 0.0
    %142 = vmatpush1.msra.mxu0 0.0
    %143 = vmatprep.subr.mxu0 0.0
    %144 = vmatpush1.msra.mxu0 0.0
    %145 = vmatprep.subr.mxu0 0.0
    %146 = vmatpush1.msra.mxu0 0.0
    %147 = vmatprep.subr.mxu0 0.0
    %148 = vmatpush1.msra.mxu0 0.0
    %149 = vmatprep.subr.mxu0 0.0
    %150 = vmatpush1.msra.mxu0 0.0
    %151 = vmatprep.subr.mxu0 0.0
    %152 = vmatpush1.msra.mxu0 0.0
    %153 = vmatprep.subr.mxu0 0.0
    %154 = vmatpush1.msra.mxu0 0.0
    %155 = vmatprep.subr.mxu0 0.0
    %156 = vmatpush1.msra.mxu0 0.0
    %157 = vmatprep.subr.mxu0 0.0
    %158 = vmatpush1.msra.mxu0 0.0
    %159 = vmatprep.subr.mxu0 0.0
    %160 = vmatpush1.msra.mxu0 0.0
    %161 = vmatprep.subr.mxu0 0.0
    %162 = vmatpush1.msra.mxu0 0.0
    %163 = vmatprep.subr.mxu0 0.0
    %164 = vmatpush1.msra.mxu0 0.0
    %165 = vmatprep.subr.mxu0 0.0
    %166 = vmatpush1.msra.mxu0 0.0
    %167 = vmatprep.subr.mxu0 0.0
    %168 = vmatpush1.msra.mxu0 0.0
    %169 = vmatprep.subr.mxu0 0.0
    %170 = vmatpush1.msra.mxu0 0.0
    %171 = vmatprep.mubr.f32.mxu0 0.0
    %172 = vmatmul.mubr.f32.gmra.mrb[0].mxu0 %v105
    %v173 = vpop.f32.mrb[0].mxu0
    %v174 = vadd.f32 %v29, %v173
    %v175 = vpop.f32.mrb[0].mxu0
    %176 = vdwg.mxu0
    %v178 = vsel %vm30, %v20, 0
    %180 = vmatprep.subr.mxu0 0.0
    %181 = vmatpush1.msra.mxu0 %v12
    %182 = vmatprep.subr.mxu0 0.0
    %183 = vmatpush1.msra.mxu0 0.0
    %184 = vmatprep.subr.mxu0 0.0
    %185 = vmatpush1.msra.mxu0 0.0
    %186 = vmatprep.subr.mxu0 0.0
    %187 = vmatpush1.msra.mxu0 0.0
    %188 = vmatprep.subr.mxu0 0.0
    %189 = vmatpush1.msra.mxu0 0.0
    %190 = vmatprep.subr.mxu0 0.0
    %191 = vmatpush1.msra.mxu0 0.0
    %192 = vmatprep.subr.mxu0 0.0
    %193 = vmatpush1.msra.mxu0 0.0
    %194 = vmatprep.subr.mxu0 0.0
    %195 = vmatpush1.msra.mxu0 0.0
    %196 = vmatprep.subr.mxu0 0.0
    %197 = vmatpush1.msra.mxu0 0.0
    %198 = vmatprep.subr.mxu0 0.0
    %199 = vmatpush1.msra.mxu0 0.0
    %200 = vmatprep.subr.mxu0 0.0
    %201 = vmatpush1.msra.mxu0 0.0
    %202 = vmatprep.subr.mxu0 0.0
    %203 = vmatpush1.msra.mxu0 0.0
    %204 = vmatprep.subr.mxu0 0.0
    %205 = vmatpush1.msra.mxu0 0.0
    %206 = vmatprep.subr.mxu0 0.0
    %207 = vmatpush1.msra.mxu0 0.0
    %208 = vmatprep.subr.mxu0 0.0
    %209 = vmatpush1.msra.mxu0 0.0
    %210 = vmatprep.subr.mxu0 0.0
    %211 = vmatpush1.msra.mxu0 0.0
    %212 = vmatprep.subr.mxu0 0.0
    %213 = vmatpush1.msra.mxu0 0.0
    %214 = vmatprep.subr.mxu0 0.0
    %215 = vmatpush1.msra.mxu0 0.0
    %216 = vmatprep.subr.mxu0 0.0
    %217 = vmatpush1.msra.mxu0 0.0
    %218 = vmatprep.subr.mxu0 0.0
    %219 = vmatpush1.msra.mxu0 0.0
    %220 = vmatprep.subr.mxu0 0.0
    %221 = vmatpush1.msra.mxu0 0.0
    %222 = vmatprep.subr.mxu0 0.0
    %223 = vmatpush1.msra.mxu0 0.0
    %224 = vmatprep.subr.mxu0 0.0
    %225 = vmatpush1.msra.mxu0 0.0
    %226 = vmatprep.subr.mxu0 0.0
    %227 = vmatpush1.msra.mxu0 0.0
    %228 = vmatprep.subr.mxu0 0.0
    %229 = vmatpush1.msra.mxu0 0.0
    %230 = vmatprep.subr.mxu0 0.0
    %231 = vmatpush1.msra.mxu0 0.0
    %232 = vmatprep.subr.mxu0 0.0
    %233 = vmatpush1.msra.mxu0 0.0
    %234 = vmatprep.subr.mxu0 0.0
    %235 = vmatpush1.msra.mxu0 0.0
    %236 = vmatprep.subr.mxu0 0.0
    %237 = vmatpush1.msra.mxu0 0.0
    %238 = vmatprep.subr.mxu0 0.0
    %239 = vmatpush1.msra.mxu0 0.0
    %240 = vmatprep.subr.mxu0 0.0
    %241 = vmatpush1.msra.mxu0 0.0
    %242 = vmatprep.subr.mxu0 0.0
    %243 = vmatpush1.msra.mxu0 0.0
    %244 = vmatprep.mubr.f32.mxu0 0.0
    %245 = vmatmul.mubr.f32.gmra.mrb[0].mxu0 %v178
    %v246 = vpop.f32.mrb[0].mxu0
    %v247 = vadd.f32 %v29, %v246
    %v248 = vpop.f32.mrb[0].mxu0
    %249 = vdwg.mxu0
    %v251 = vsel %vm30, %v21, 0
    %253 = vmatprep.subr.mxu0 0.0
    %254 = vmatpush1.msra.mxu0 %v12
    %255 = vmatprep.subr.mxu0 0.0
    %256 = vmatpush1.msra.mxu0 0.0
    %257 = vmatprep.subr.mxu0 0.0
    %258 = vmatpush1.msra.mxu0 0.0
    %259 = vmatprep.subr.mxu0 0.0
    %260 = vmatpush1.msra.mxu0 0.0
    %261 = vmatprep.subr.mxu0 0.0
    %262 = vmatpush1.msra.mxu0 0.0
    %263 = vmatprep.subr.mxu0 0.0
    %264 = vmatpush1.msra.mxu0 0.0
    %265 = vmatprep.subr.mxu0 0.0
    %266 = vmatpush1.msra.mxu0 0.0
    %267 = vmatprep.subr.mxu0 0.0
    %268 = vmatpush1.msra.mxu0 0.0
    %269 = vmatprep.subr.mxu0 0.0
    %270 = vmatpush1.msra.mxu0 0.0
    %271 = vmatprep.subr.mxu0 0.0
    %272 = vmatpush1.msra.mxu0 0.0
    %273 = vmatprep.subr.mxu0 0.0
    %274 = vmatpush1.msra.mxu0 0.0
    %275 = vmatprep.subr.mxu0 0.0
    %276 = vmatpush1.msra.mxu0 0.0
    %277 = vmatprep.subr.mxu0 0.0
    %278 = vmatpush1.msra.mxu0 0.0
    %279 = vmatprep.subr.mxu0 0.0
    %280 = vmatpush1.msra.mxu0 0.0
    %281 = vmatprep.subr.mxu0 0.0
    %282 = vmatpush1.msra.mxu0 0.0
    %283 = vmatprep.subr.mxu0 0.0
    %284 = vmatpush1.msra.mxu0 0.0
    %285 = vmatprep.subr.mxu0 0.0
    %286 = vmatpush1.msra.mxu0 0.0
    %287 = vmatprep.subr.mxu0 0.0
    %288 = vmatpush1.msra.mxu0 0.0
    %289 = vmatprep.subr.mxu0 0.0
    %290 = vmatpush1.msra.mxu0 0.0
    %291 = vmatprep.subr.mxu0 0.0
    %292 = vmatpush1.msra.mxu0 0.0
    %293 = vmatprep.subr.mxu0 0.0
    %294 = vmatpush1.msra.mxu0 0.0
    %295 = vmatprep.subr.mxu0 0.0
    %296 = vmatpush1.msra.mxu0 0.0
    %297 = vmatprep.subr.mxu0 0.0
    %298 = vmatpush1.msra.mxu0 0.0
    %299 = vmatprep.subr.mxu0 0.0
    %300 = vmatpush1.msra.mxu0 0.0
    %301 = vmatprep.subr.mxu0 0.0
    %302 = vmatpush1.msra.mxu0 0.0
    %303 = vmatprep.subr.mxu0 0.0
    %304 = vmatpush1.msra.mxu0 0.0
    %305 = vmatprep.subr.mxu0 0.0
    %306 = vmatpush1.msra.mxu0 0.0
    %307 = vmatprep.subr.mxu0 0.0
    %308 = vmatpush1.msra.mxu0 0.0
    %309 = vmatprep.subr.mxu0 0.0
    %310 = vmatpush1.msra.mxu0 0.0
    %311 = vmatprep.subr.mxu0 0.0
    %312 = vmatpush1.msra.mxu0 0.0
    %313 = vmatprep.subr.mxu0 0.0
    %314 = vmatpush1.msra.mxu0 0.0
    %315 = vmatprep.subr.mxu0 0.0
    %316 = vmatpush1.msra.mxu0 0.0
    %317 = vmatprep.mubr.f32.mxu0 0.0
    %318 = vmatmul.mubr.f32.gmra.mrb[0].mxu0 %v251
    %v319 = vpop.f32.mrb[0].mxu0
    %v320 = vadd.f32 %v29, %v319
    %v321 = vpop.f32.mrb[0].mxu0
    %322 = vdwg.mxu0
    %v324 = vsel %vm30, %v22, 0
    %326 = vmatprep.subr.mxu0 0.0
    %327 = vmatpush1.msra.mxu0 %v12
    %328 = vmatprep.subr.mxu0 0.0
    %329 = vmatpush1.msra.mxu0 0.0
    %330 = vmatprep.subr.mxu0 0.0
    %331 = vmatpush1.msra.mxu0 0.0
    %332 = vmatprep.subr.mxu0 0.0
    %333 = vmatpush1.msra.mxu0 0.0
    %334 = vmatprep.subr.mxu0 0.0
    %335 = vmatpush1.msra.mxu0 0.0
    %336 = vmatprep.subr.mxu0 0.0
    %337 = vmatpush1.msra.mxu0 0.0
    %338 = vmatprep.subr.mxu0 0.0
    %339 = vmatpush1.msra.mxu0 0.0
    %340 = vmatprep.subr.mxu0 0.0
    %341 = vmatpush1.msra.mxu0 0.0
    %342 = vmatprep.subr.mxu0 0.0
    %343 = vmatpush1.msra.mxu0 0.0
    %344 = vmatprep.subr.mxu0 0.0
    %345 = vmatpush1.msra.mxu0 0.0
    %346 = vmatprep.subr.mxu0 0.0
    %347 = vmatpush1.msra.mxu0 0.0
    %348 = vmatprep.subr.mxu0 0.0
    %349 = vmatpush1.msra.mxu0 0.0
    %350 = vmatprep.subr.mxu0 0.0
    %351 = vmatpush1.msra.mxu0 0.0
    %352 = vmatprep.subr.mxu0 0.0
    %353 = vmatpush1.msra.mxu0 0.0
    %354 = vmatprep.subr.mxu0 0.0
    %355 = vmatpush1.msra.mxu0 0.0
    %356 = vmatprep.subr.mxu0 0.0
    %357 = vmatpush1.msra.mxu0 0.0
    %358 = vmatprep.subr.mxu0 0.0
    %359 = vmatpush1.msra.mxu0 0.0
    %360 = vmatprep.subr.mxu0 0.0
    %361 = vmatpush1.msra.mxu0 0.0
    %362 = vmatprep.subr.mxu0 0.0
    %363 = vmatpush1.msra.mxu0 0.0
    %364 = vmatprep.subr.mxu0 0.0
    %365 = vmatpush1.msra.mxu0 0.0
    %366 = vmatprep.subr.mxu0 0.0
    %367 = vmatpush1.msra.mxu0 0.0
    %368 = vmatprep.subr.mxu0 0.0
    %369 = vmatpush1.msra.mxu0 0.0
    %370 = vmatprep.subr.mxu0 0.0
    %371 = vmatpush1.msra.mxu0 0.0
    %372 = vmatprep.subr.mxu0 0.0
    %373 = vmatpush1.msra.mxu0 0.0
    %374 = vmatprep.subr.mxu0 0.0
    %375 = vmatpush1.msra.mxu0 0.0
    %376 = vmatprep.subr.mxu0 0.0
    %377 = vmatpush1.msra.mxu0 0.0
    %378 = vmatprep.subr.mxu0 0.0
    %379 = vmatpush1.msra.mxu0 0.0
    %380 = vmatprep.subr.mxu0 0.0
    %381 = vmatpush1.msra.mxu0 0.0
    %382 = vmatprep.subr.mxu0 0.0
    %383 = vmatpush1.msra.mxu0 0.0
    %384 = vmatprep.subr.mxu0 0.0
    %385 = vmatpush1.msra.mxu0 0.0
    %386 = vmatprep.subr.mxu0 0.0
    %387 = vmatpush1.msra.mxu0 0.0
    %388 = vmatprep.subr.mxu0 0.0
    %389 = vmatpush1.msra.mxu0 0.0
    %390 = vmatprep.mubr.f32.mxu0 0.0
    %391 = vmatmul.mubr.f32.gmra.mrb[0].mxu0 %v324
    %v392 = vpop.f32.mrb[0].mxu0
    %v393 = vadd.f32 %v29, %v392
    %v394 = vpop.f32.mrb[0].mxu0
    %395 = vdwg.mxu0
    %v397 = vsel %vm30, %v23, 0
    %399 = vmatprep.subr.mxu0 0.0
    %400 = vmatpush1.msra.mxu0 %v12
    %401 = vmatprep.subr.mxu0 0.0
    %402 = vmatpush1.msra.mxu0 0.0
    %403 = vmatprep.subr.mxu0 0.0
    %404 = vmatpush1.msra.mxu0 0.0
    %405 = vmatprep.subr.mxu0 0.0
    %406 = vmatpush1.msra.mxu0 0.0
    %407 = vmatprep.subr.mxu0 0.0
    %408 = vmatpush1.msra.mxu0 0.0
    %409 = vmatprep.subr.mxu0 0.0
    %410 = vmatpush1.msra.mxu0 0.0
    %411 = vmatprep.subr.mxu0 0.0
    %412 = vmatpush1.msra.mxu0 0.0
    %413 = vmatprep.subr.mxu0 0.0
    %414 = vmatpush1.msra.mxu0 0.0
    %415 = vmatprep.subr.mxu0 0.0
    %416 = vmatpush1.msra.mxu0 0.0
    %417 = vmatprep.subr.mxu0 0.0
    %418 = vmatpush1.msra.mxu0 0.0
    %419 = vmatprep.subr.mxu0 0.0
    %420 = vmatpush1.msra.mxu0 0.0
    %421 = vmatprep.subr.mxu0 0.0
    %422 = vmatpush1.msra.mxu0 0.0
    %423 = vmatprep.subr.mxu0 0.0
    %424 = vmatpush1.msra.mxu0 0.0
    %425 = vmatprep.subr.mxu0 0.0
    %426 = vmatpush1.msra.mxu0 0.0
    %427 = vmatprep.subr.mxu0 0.0
    %428 = vmatpush1.msra.mxu0 0.0
    %429 = vmatprep.subr.mxu0 0.0
    %430 = vmatpush1.msra.mxu0 0.0
    %431 = vmatprep.subr.mxu0 0.0
    %432 = vmatpush1.msra.mxu0 0.0
    %433 = vmatprep.subr.mxu0 0.0
    %434 = vmatpush1.msra.mxu0 0.0
    %435 = vmatprep.subr.mxu0 0.0
    %436 = vmatpush1.msra.mxu0 0.0
    %437 = vmatprep.subr.mxu0 0.0
    %438 = vmatpush1.msra.mxu0 0.0
    %439 = vmatprep.subr.mxu0 0.0
    %440 = vmatpush1.msra.mxu0 0.0
    %441 = vmatprep.subr.mxu0 0.0
    %442 = vmatpush1.msra.mxu0 0.0
    %443 = vmatprep.subr.mxu0 0.0
    %444 = vmatpush1.msra.mxu0 0.0
    %445 = vmatprep.subr.mxu0 0.0
    %446 = vmatpush1.msra.mxu0 0.0
    %447 = vmatprep.subr.mxu0 0.0
    %448 = vmatpush1.msra.mxu0 0.0
    %449 = vmatprep.subr.mxu0 0.0
    %450 = vmatpush1.msra.mxu0 0.0
    %451 = vmatprep.subr.mxu0 0.0
    %452 = vmatpush1.msra.mxu0 0.0
    %453 = vmatprep.subr.mxu0 0.0
    %454 = vmatpush1.msra.mxu0 0.0
    %455 = vmatprep.subr.mxu0 0.0
    %456 = vmatpush1.msra.mxu0 0.0
    %457 = vmatprep.subr.mxu0 0.0
    %458 = vmatpush1.msra.mxu0 0.0
    %459 = vmatprep.subr.mxu0 0.0
    %460 = vmatpush1.msra.mxu0 0.0
    %461 = vmatprep.subr.mxu0 0.0
    %462 = vmatpush1.msra.mxu0 0.0
    %463 = vmatprep.mubr.f32.mxu0 0.0
    %464 = vmatmul.mubr.f32.gmra.mrb[0].mxu0 %v397
    %v465 = vpop.f32.mrb[0].mxu0
    %v466 = vadd.f32 %v29, %v465
    %v467 = vpop.f32.mrb[0].mxu0
    %468 = vdwg.mxu0
    %v470 = vsel %vm30, %v24, 0
    %472 = vmatprep.subr.mxu0 0.0
    %473 = vmatpush1.msra.mxu0 %v12
    %474 = vmatprep.subr.mxu0 0.0
    %475 = vmatpush1.msra.mxu0 0.0
    %476 = vmatprep.subr.mxu0 0.0
    %477 = vmatpush1.msra.mxu0 0.0
    %478 = vmatprep.subr.mxu0 0.0
    %479 = vmatpush1.msra.mxu0 0.0
    %480 = vmatprep.subr.mxu0 0.0
    %481 = vmatpush1.msra.mxu0 0.0
    %482 = vmatprep.subr.mxu0 0.0
    %483 = vmatpush1.msra.mxu0 0.0
    %484 = vmatprep.subr.mxu0 0.0
    %485 = vmatpush1.msra.mxu0 0.0
    %486 = vmatprep.subr.mxu0 0.0
    %487 = vmatpush1.msra.mxu0 0.0
    %488 = vmatprep.subr.mxu0 0.0
    %489 = vmatpush1.msra.mxu0 0.0
    %490 = vmatprep.subr.mxu0 0.0
    %491 = vmatpush1.msra.mxu0 0.0
    %492 = vmatprep.subr.mxu0 0.0
    %493 = vmatpush1.msra.mxu0 0.0
    %494 = vmatprep.subr.mxu0 0.0
    %495 = vmatpush1.msra.mxu0 0.0
    %496 = vmatprep.subr.mxu0 0.0
    %497 = vmatpush1.msra.mxu0 0.0
    %498 = vmatprep.subr.mxu0 0.0
    %499 = vmatpush1.msra.mxu0 0.0
    %500 = vmatprep.subr.mxu0 0.0
    %501 = vmatpush1.msra.mxu0 0.0
    %502 = vmatprep.subr.mxu0 0.0
    %503 = vmatpush1.msra.mxu0 0.0
    %504 = vmatprep.subr.mxu0 0.0
    %505 = vmatpush1.msra.mxu0 0.0
    %506 = vmatprep.subr.mxu0 0.0
    %507 = vmatpush1.msra.mxu0 0.0
    %508 = vmatprep.subr.mxu0 0.0
    %509 = vmatpush1.msra.mxu0 0.0
    %510 = vmatprep.subr.mxu0 0.0
    %511 = vmatpush1.msra.mxu0 0.0
    %512 = vmatprep.subr.mxu0 0.0
    %513 = vmatpush1.msra.mxu0 0.0
    %514 = vmatprep.subr.mxu0 0.0
    %515 = vmatpush1.msra.mxu0 0.0
    %516 = vmatprep.subr.mxu0 0.0
    %517 = vmatpush1.msra.mxu0 0.0
    %518 = vmatprep.subr.mxu0 0.0
    %519 = vmatpush1.msra.mxu0 0.0
    %520 = vmatprep.subr.mxu0 0.0
    %521 = vmatpush1.msra.mxu0 0.0
    %522 = vmatprep.subr.mxu0 0.0
    %523 = vmatpush1.msra.mxu0 0.0
    %524 = vmatprep.subr.mxu0 0.0
    %525 = vmatpush1.msra.mxu0 0.0
    %526 = vmatprep.subr.mxu0 0.0
    %527 = vmatpush1.msra.mxu0 0.0
    %528 = vmatprep.subr.mxu0 0.0
    %529 = vmatpush1.msra.mxu0 0.0
    %530 = vmatprep.subr.mxu0 0.0
    %531 = vmatpush1.msra.mxu0 0.0
    %532 = vmatprep.subr.mxu0 0.0
    %533 = vmatpush1.msra.mxu0 0.0
    %534 = vmatprep.subr.mxu0 0.0
    %535 = vmatpush1.msra.mxu0 0.0
    %536 = vmatprep.mubr.f32.mxu0 0.0
    %537 = vmatmul.mubr.f32.gmra.mrb[0].mxu0 %v470
    %v538 = vpop.f32.mrb[0].mxu0
    %v539 = vadd.f32 %v29, %v538
    %v540 = vpop.f32.mrb[0].mxu0
    %541 = vdwg.mxu0
    %v543 = vsel %vm30, %v25, 0
    %545 = vmatprep.subr.mxu0 0.0
    %546 = vmatpush1.msra.mxu0 %v12
    %547 = vmatprep.subr.mxu0 0.0
    %548 = vmatpush1.msra.mxu0 0.0
    %549 = vmatprep.subr.mxu0 0.0
    %550 = vmatpush1.msra.mxu0 0.0
    %551 = vmatprep.subr.mxu0 0.0
    %552 = vmatpush1.msra.mxu0 0.0
    %553 = vmatprep.subr.mxu0 0.0
    %554 = vmatpush1.msra.mxu0 0.0
    %555 = vmatprep.subr.mxu0 0.0
    %556 = vmatpush1.msra.mxu0 0.0
    %557 = vmatprep.subr.mxu0 0.0
    %558 = vmatpush1.msra.mxu0 0.0
    %559 = vmatprep.subr.mxu0 0.0
    %560 = vmatpush1.msra.mxu0 0.0
    %561 = vmatprep.subr.mxu0 0.0
    %562 = vmatpush1.msra.mxu0 0.0
    %563 = vmatprep.subr.mxu0 0.0
    %564 = vmatpush1.msra.mxu0 0.0
    %565 = vmatprep.subr.mxu0 0.0
    %566 = vmatpush1.msra.mxu0 0.0
    %567 = vmatprep.subr.mxu0 0.0
    %568 = vmatpush1.msra.mxu0 0.0
    %569 = vmatprep.subr.mxu0 0.0
    %570 = vmatpush1.msra.mxu0 0.0
    %571 = vmatprep.subr.mxu0 0.0
    %572 = vmatpush1.msra.mxu0 0.0
    %573 = vmatprep.subr.mxu0 0.0
    %574 = vmatpush1.msra.mxu0 0.0
    %575 = vmatprep.subr.mxu0 0.0
    %576 = vmatpush1.msra.mxu0 0.0
    %577 = vmatprep.subr.mxu0 0.0
    %578 = vmatpush1.msra.mxu0 0.0
    %579 = vmatprep.subr.mxu0 0.0
    %580 = vmatpush1.msra.mxu0 0.0
    %581 = vmatprep.subr.mxu0 0.0
    %582 = vmatpush1.msra.mxu0 0.0
    %583 = vmatprep.subr.mxu0 0.0
    %584 = vmatpush1.msra.mxu0 0.0
    %585 = vmatprep.subr.mxu0 0.0
    %586 = vmatpush1.msra.mxu0 0.0
    %587 = vmatprep.subr.mxu0 0.0
    %588 = vmatpush1.msra.mxu0 0.0
    %589 = vmatprep.subr.mxu0 0.0
    %590 = vmatpush1.msra.mxu0 0.0
    %591 = vmatprep.subr.mxu0 0.0
    %592 = vmatpush1.msra.mxu0 0.0
    %593 = vmatprep.subr.mxu0 0.0
    %594 = vmatpush1.msra.mxu0 0.0
    %595 = vmatprep.subr.mxu0 0.0
    %596 = vmatpush1.msra.mxu0 0.0
    %597 = vmatprep.subr.mxu0 0.0
    %598 = vmatpush1.msra.mxu0 0.0
    %599 = vmatprep.subr.mxu0 0.0
    %600 = vmatpush1.msra.mxu0 0.0
    %601 = vmatprep.subr.mxu0 0.0
    %602 = vmatpush1.msra.mxu0 0.0
    %603 = vmatprep.subr.mxu0 0.0
    %604 = vmatpush1.msra.mxu0 0.0
    %605 = vmatprep.subr.mxu0 0.0
    %606 = vmatpush1.msra.mxu0 0.0
    %607 = vmatprep.subr.mxu0 0.0
    %608 = vmatpush1.msra.mxu0 0.0
    %609 = vmatprep.mubr.f32.mxu0 0.0
    %610 = vmatmul.mubr.f32.gmra.mrb[0].mxu0 %v543
    %v611 = vpop.f32.mrb[0].mxu0
    %v612 = vadd.f32 %v29, %v611
    %v613 = vpop.f32.mrb[0].mxu0
    %614 = vdwg.mxu0
    %vm615 = vcmask 130048
    %v617 = vsel %vm615, 0.0, 0
    %619 = vmatprep.subr.mxu0 0.0
    %620 = vmatpush1.msra.mxu0 %v13
    %621 = vmatprep.subr.mxu0 0.0
    %622 = vmatpush1.msra.mxu0 %v14
    %623 = vmatprep.subr.mxu0 0.0
    %624 = vmatpush1.msra.mxu0 0.0
    %625 = vmatprep.subr.mxu0 0.0
    %626 = vmatpush1.msra.mxu0 0.0
    %627 = vmatprep.subr.mxu0 0.0
    %628 = vmatpush1.msra.mxu0 0.0
    %629 = vmatprep.subr.mxu0 0.0
    %630 = vmatpush1.msra.mxu0 0.0
    %631 = vmatprep.subr.mxu0 0.0
    %632 = vmatpush1.msra.mxu0 0.0
    %633 = vmatprep.subr.mxu0 0.0
    %634 = vmatpush1.msra.mxu0 0.0
    %635 = vmatprep.subr.mxu0 0.0
    %636 = vmatpush1.msra.mxu0 0.0
    %637 = vmatprep.subr.mxu0 0.0
    %638 = vmatpush1.msra.mxu0 0.0
    %639 = vmatprep.subr.mxu0 0.0
    %640 = vmatpush1.msra.mxu0 0.0
    %641 = vmatprep.subr.mxu0 0.0
    %642 = vmatpush1.msra.mxu0 0.0
    %643 = vmatprep.subr.mxu0 0.0
    %644 = vmatpush1.msra.mxu0 0.0
    %645 = vmatprep.subr.mxu0 0.0
    %646 = vmatpush1.msra.mxu0 0.0
    %647 = vmatprep.subr.mxu0 0.0
    %648 = vmatpush1.msra.mxu0 0.0
    %649 = vmatprep.subr.mxu0 0.0
    %650 = vmatpush1.msra.mxu0 0.0
    %651 = vmatprep.subr.mxu0 0.0
    %652 = vmatpush1.msra.mxu0 0.0
    %653 = vmatprep.subr.mxu0 0.0
    %654 = vmatpush1.msra.mxu0 0.0
    %655 = vmatprep.subr.mxu0 0.0
    %656 = vmatpush1.msra.mxu0 0.0
    %657 = vmatprep.subr.mxu0 0.0
    %658 = vmatpush1.msra.mxu0 0.0
    %659 = vmatprep.subr.mxu0 0.0
    %660 = vmatpush1.msra.mxu0 0.0
    %661 = vmatprep.subr.mxu0 0.0
    %662 = vmatpush1.msra.mxu0 0.0
    %663 = vmatprep.subr.mxu0 0.0
    %664 = vmatpush1.msra.mxu0 0.0
    %665 = vmatprep.subr.mxu0 0.0
    %666 = vmatpush1.msra.mxu0 0.0
    %667 = vmatprep.subr.mxu0 0.0
    %668 = vmatpush1.msra.mxu0 0.0
    %669 = vmatprep.subr.mxu0 0.0
    %670 = vmatpush1.msra.mxu0 0.0
    %671 = vmatprep.subr.mxu0 0.0
    %672 = vmatpush1.msra.mxu0 0.0
    %673 = vmatprep.subr.mxu0 0.0
    %674 = vmatpush1.msra.mxu0 0.0
    %675 = vmatprep.subr.mxu0 0.0
    %676 = vmatpush1.msra.mxu0 0.0
    %677 = vmatprep.subr.mxu0 0.0
    %678 = vmatpush1.msra.mxu0 0.0
    %679 = vmatprep.subr.mxu0 0.0
    %680 = vmatpush1.msra.mxu0 0.0
    %681 = vmatprep.subr.mxu0 0.0
    %682 = vmatpush1.msra.mxu0 0.0
    %683 = vmatprep.mubr.f32.mxu0 0.0
    %684 = vmatmul.mubr.f32.gmra.mrb[0].mxu0 %v617
    %v685 = vpop.f32.mrb[0].mxu0
    %v686 = vadd.f32 0.0, %v685
    %v687 = vpop.f32.mrb[0].mxu0
    %688 = vdwg.mxu0
    %v689 = vadd.f32 %v101, %v686
    %v690 = vxor.u32 %v689, 2147483648
    %v691 = vmul.f32 %v690, 1.442695
    %v692 = vpow.pop %v691
    %v693 = vadd.f32 %v692, 1.0
    %v694 = vrcp.pop %v693
    %v695 = vmul.f32 1.0, %v694
    %v696 = vmul.f32 %v695, 2.0
    %v697 = vsub.f32 %v696, 1.0
    %v698 = vmul.f32 %v695, 0.0
    %700 = vrot.lane.b32.xlu0 %v697, 96
    %v701 = vpop.permute.xlu0 %700
    %v703 = vmul.f32 %v695, %v701
    %705 = vrot.lane.b32.xlu0 %v703, 16
    %v706 = vpop.permute.xlu0 %705
    %v708 = vadd.f32 %v698, %v706
    %v709 = vtanh.pop %v708
    %711 = vrot.lane.b32.xlu0 %v709, 32
    %v712 = vpop.permute.xlu0 %711
    %v714 = vmul.f32 %v695, %v712
    %716 = vrot.lane.b32.xlu0 %v714, 80
    %v717 = vpop.permute.xlu0 %716
    %v718 = vsel %vm615, %v717, 0
    %720 = vmatprep.subr.mxu0 0.0
    %721 = vmatpush1.msra.mxu0 %v13
    %722 = vmatprep.subr.mxu0 0.0
    %723 = vmatpush1.msra.mxu0 %v14
    %724 = vmatprep.subr.mxu0 0.0
    %725 = vmatpush1.msra.mxu0 0.0
    %726 = vmatprep.subr.mxu0 0.0
    %727 = vmatpush1.msra.mxu0 0.0
    %728 = vmatprep.subr.mxu0 0.0
    %729 = vmatpush1.msra.mxu0 0.0
    %730 = vmatprep.subr.mxu0 0.0
    %731 = vmatpush1.msra.mxu0 0.0
    %732 = vmatprep.subr.mxu0 0.0
    %733 = vmatpush1.msra.mxu0 0.0
    %734 = vmatprep.subr.mxu0 0.0
    %735 = vmatpush1.msra.mxu0 0.0
    %736 = vmatprep.subr.mxu0 0.0
    %737 = vmatpush1.msra.mxu0 0.0
    %738 = vmatprep.subr.mxu0 0.0
    %739 = vmatpush1.msra.mxu0 0.0
    %740 = vmatprep.subr.mxu0 0.0
    %741 = vmatpush1.msra.mxu0 0.0
    %742 = vmatprep.subr.mxu0 0.0
    %743 = vmatpush1.msra.mxu0 0.0
    %744 = vmatprep.subr.mxu0 0.0
    %745 = vmatpush1.msra.mxu0 0.0
    %746 = vmatprep.subr.mxu0 0.0
    %747 = vmatpush1.msra.mxu0 0.0
    %748 = vmatprep.subr.mxu0 0.0
    %749 = vmatpush1.msra.mxu0 0.0
    %750 = vmatprep.subr.mxu0 0.0
    %751 = vmatpush1.msra.mxu0 0.0
    %752 = vmatprep.subr.mxu0 0.0
    %753 = vmatpush1.msra.mxu0 0.0
    %754 = vmatprep.subr.mxu0 0.0
    %755 = vmatpush1.msra.mxu0 0.0
    %756 = vmatprep.subr.mxu0 0.0
    %757 = vmatpush1.msra.mxu0 0.0
    %758 = vmatprep.subr.mxu0 0.0
    %759 = vmatpush1.msra.mxu0 0.0
    %760 = vmatprep.subr.mxu0 0.0
    %761 = vmatpush1.msra.mxu0 0.0
    %762 = vmatprep.subr.mxu0 0.0
    %763 = vmatpush1.msra.mxu0 0.0
    %764 = vmatprep.subr.mxu0 0.0
    %765 = vmatpush1.msra.mxu0 0.0
    %766 = vmatprep.subr.mxu0 0.0
    %767 = vmatpush1.msra.mxu0 0.0
    %768 = vmatprep.subr.mxu0 0.0
    %769 = vmatpush1.msra.mxu0 0.0
    %770 = vmatprep.subr.mxu0 0.0
    %771 = vmatpush1.msra.mxu0 0.0
    %772 = vmatprep.subr.mxu0 0.0
    %773 = vmatpush1.msra.mxu0 0.0
    %774 = vmatprep.subr.mxu0 0.0
    %775 = vmatpush1.msra.mxu0 0.0
    %776 = vmatprep.subr.mxu0 0.0
    %777 = vmatpush1.msra.mxu0 0.0
    %778 = vmatprep.subr.mxu0 0.0
    %779 = vmatpush1.msra.mxu0 0.0
    %780 = vmatprep.subr.mxu0 0.0
    %781 = vmatpush1.msra.mxu0 0.0
    %782 = vmatprep.subr.mxu0 0.0
    %783 = vmatpush1.msra.mxu0 0.0
    %784 = vmatprep.mubr.f32.mxu0 0.0
    %785 = vmatmul.mubr.f32.gmra.mrb[0].mxu0 %v718
    %v786 = vpop.f32.mrb[0].mxu0
    %v787 = vadd.f32 0.0, %v786
    %v788 = vpop.f32.mrb[0].mxu0
    %789 = vdwg.mxu0
    %v790 = vadd.f32 %v174, %v787
    %v791 = vxor.u32 %v790, 2147483648
    %v792 = vmul.f32 %v791, 1.442695
    %v793 = vpow.pop %v792
    %v794 = vadd.f32 %v793, 1.0
    %v795 = vrcp.pop %v794
    %v796 = vmul.f32 1.0, %v795
    %v797 = vmul.f32 %v796, 2.0
    %v798 = vsub.f32 %v797, 1.0
    %v799 = vmul.f32 %v796, %v708
    %801 = vrot.lane.b32.xlu0 %v798, 96
    %v802 = vpop.permute.xlu0 %801
    %v804 = vmul.f32 %v796, %v802
    %806 = vrot.lane.b32.xlu0 %v804, 16
    %v807 = vpop.permute.xlu0 %806
    %v809 = vadd.f32 %v799, %v807
    %v810 = vtanh.pop %v809
    %812 = vrot.lane.b32.xlu0 %v810, 32
    %v813 = vpop.permute.xlu0 %812
    %v815 = vmul.f32 %v796, %v813
    %817 = vrot.lane.b32.xlu0 %v815, 80
    %v818 = vpop.permute.xlu0 %817
    %v819 = vsel %vm615, %v818, 0
    %821 = vmatprep.subr.mxu0 0.0
    %822 = vmatpush1.msra.mxu0 %v13
    %823 = vmatprep.subr.mxu0 0.0
    %824 = vmatpush1.msra.mxu0 %v14
    %825 = vmatprep.subr.mxu0 0.0
    %826 = vmatpush1.msra.mxu0 0.0
    %827 = vmatprep.subr.mxu0 0.0
    %828 = vmatpush1.msra.mxu0 0.0
    %829 = vmatprep.subr.mxu0 0.0
    %830 = vmatpush1.msra.mxu0 0.0
    %831 = vmatprep.subr.mxu0 0.0
    %832 = vmatpush1.msra.mxu0 0.0
    %833 = vmatprep.subr.mxu0 0.0
    %834 = vmatpush1.msra.mxu0 0.0
    %835 = vmatprep.subr.mxu0 0.0
    %836 = vmatpush1.msra.mxu0 0.0
    %837 = vmatprep.subr.mxu0 0.0
    %838 = vmatpush1.msra.mxu0 0.0
    %839 = vmatprep.subr.mxu0 0.0
    %840 = vmatpush1.msra.mxu0 0.0
    %841 = vmatprep.subr.mxu0 0.0
    %842 = vmatpush1.msra.mxu0 0.0
    %843 = vmatprep.subr.mxu0 0.0
    %844 = vmatpush1.msra.mxu0 0.0
    %845 = vmatprep.subr.mxu0 0.0
    %846 = vmatpush1.msra.mxu0 0.0
    %847 = vmatprep.subr.mxu0 0.0
    %848 = vmatpush1.msra.mxu0 0.0
    %849 = vmatprep.subr.mxu0 0.0
    %850 = vmatpush1.msra.mxu0 0.0
    %851 = vmatprep.subr.mxu0 0.0
    %852 = vmatpush1.msra.mxu0 0.0
    %853 = vmatprep.subr.mxu0 0.0
    %854 = vmatpush1.msra.mxu0 0.0
    %855 = vmatprep.subr.mxu0 0.0
    %856 = vmatpush1.msra.mxu0 0.0
    %857 = vmatprep.subr.mxu0 0.0
    %858 = vmatpush1.msra.mxu0 0.0
    %859 = vmatprep.subr.mxu0 0.0
    %860 = vmatpush1.msra.mxu0 0.0
    %861 = vmatprep.subr.mxu0 0.0
    %862 = vmatpush1.msra.mxu0 0.0
    %863 = vmatprep.subr.mxu0 0.0
    %864 = vmatpush1.msra.mxu0 0.0
    %865 = vmatprep.subr.mxu0 0.0
    %866 = vmatpush1.msra.mxu0 0.0
    %867 = vmatprep.subr.mxu0 0.0
    %868 = vmatpush1.msra.mxu0 0.0
    %869 = vmatprep.subr.mxu0 0.0
    %870 = vmatpush1.msra.mxu0 0.0
    %871 = vmatprep.subr.mxu0 0.0
    %872 = vmatpush1.msra.mxu0 0.0
    %873 = vmatprep.subr.mxu0 0.0
    %874 = vmatpush1.msra.mxu0 0.0
    %875 = vmatprep.subr.mxu0 0.0
    %876 = vmatpush1.msra.mxu0 0.0
    %877 = vmatprep.subr.mxu0 0.0
    %878 = vmatpush1.msra.mxu0 0.0
    %879 = vmatprep.subr.mxu0 0.0
    %880 = vmatpush1.msra.mxu0 0.0
    %881 = vmatprep.subr.mxu0 0.0
    %882 = vmatpush1.msra.mxu0 0.0
    %883 = vmatprep.subr.mxu0 0.0
    %884 = vmatpush1.msra.mxu0 0.0
    %885 = vmatprep.mubr.f32.mxu0 0.0
    %886 = vmatmul.mubr.f32.gmra.mrb[0].mxu0 %v819
    %v887 = vpop.f32.mrb[0].mxu0
    %v888 = vadd.f32 0.0, %v887
    %v889 = vpop.f32.mrb[0].mxu0
    %890 = vdwg.mxu0
    %v891 = vadd.f32 %v247, %v888
    %v892 = vxor.u32 %v891, 2147483648
    %v893 = vmul.f32 %v892, 1.442695
    %v894 = vpow.pop %v893
    %v895 = vadd.f32 %v894, 1.0
    %v896 = vrcp.pop %v895
    %v897 = vmul.f32 1.0, %v896
    %v898 = vmul.f32 %v897, 2.0
    %v899 = vsub.f32 %v898, 1.0
    %v900 = vmul.f32 %v897, %v809
    %902 = vrot.lane.b32.xlu0 %v899, 96
    %v903 = vpop.permute.xlu0 %902
    %v905 = vmul.f32 %v897, %v903
    %907 = vrot.lane.b32.xlu0 %v905, 16
    %v908 = vpop.permute.xlu0 %907
    %v910 = vadd.f32 %v900, %v908
    %v911 = vtanh.pop %v910
    %913 = vrot.lane.b32.xlu0 %v911, 32
    %v914 = vpop.permute.xlu0 %913
    %v916 = vmul.f32 %v897, %v914
    %918 = vrot.lane.b32.xlu0 %v916, 80
    %v919 = vpop.permute.xlu0 %918
    %v920 = vsel %vm615, %v919, 0
    %922 = vmatprep.subr.mxu0 0.0
    %923 = vmatpush1.msra.mxu0 %v13
    %924 = vmatprep.subr.mxu0 0.0
    %925 = vmatpush1.msra.mxu0 %v14
    %926 = vmatprep.subr.mxu0 0.0
    %927 = vmatpush1.msra.mxu0 0.0
    %928 = vmatprep.subr.mxu0 0.0
    %929 = vmatpush1.msra.mxu0 0.0
    %930 = vmatprep.subr.mxu0 0.0
    %931 = vmatpush1.msra.mxu0 0.0
    %932 = vmatprep.subr.mxu0 0.0
    %933 = vmatpush1.msra.mxu0 0.0
    %934 = vmatprep.subr.mxu0 0.0
    %935 = vmatpush1.msra.mxu0 0.0
    %936 = vmatprep.subr.mxu0 0.0
    %937 = vmatpush1.msra.mxu0 0.0
    %938 = vmatprep.subr.mxu0 0.0
    %939 = vmatpush1.msra.mxu0 0.0
    %940 = vmatprep.subr.mxu0 0.0
    %941 = vmatpush1.msra.mxu0 0.0
    %942 = vmatprep.subr.mxu0 0.0
    %943 = vmatpush1.msra.mxu0 0.0
    %944 = vmatprep.subr.mxu0 0.0
    %945 = vmatpush1.msra.mxu0 0.0
    %946 = vmatprep.subr.mxu0 0.0
    %947 = vmatpush1.msra.mxu0 0.0
    %948 = vmatprep.subr.mxu0 0.0
    %949 = vmatpush1.msra.mxu0 0.0
    %950 = vmatprep.subr.mxu0 0.0
    %951 = vmatpush1.msra.mxu0 0.0
    %952 = vmatprep.subr.mxu0 0.0
    %953 = vmatpush1.msra.mxu0 0.0
    %954 = vmatprep.subr.mxu0 0.0
    %955 = vmatpush1.msra.mxu0 0.0
    %956 = vmatprep.subr.mxu0 0.0
    %957 = vmatpush1.msra.mxu0 0.0
    %958 = vmatprep.subr.mxu0 0.0
    %959 = vmatpush1.msra.mxu0 0.0
    %960 = vmatprep.subr.mxu0 0.0
    %961 = vmatpush1.msra.mxu0 0.0
    %962 = vmatprep.subr.mxu0 0.0
    %963 = vmatpush1.msra.mxu0 0.0
    %964 = vmatprep.subr.mxu0 0.0
    %965 = vmatpush1.msra.mxu0 0.0
    %966 = vmatprep.subr.mxu0 0.0
    %967 = vmatpush1.msra.mxu0 0.0
    %968 = vmatprep.subr.mxu0 0.0
    %969 = vmatpush1.msra.mxu0 0.0
    %970 = vmatprep.subr.mxu0 0.0
    %971 = vmatpush1.msra.mxu0 0.0
    %972 = vmatprep.subr.mxu0 0.0
    %973 = vmatpush1.msra.mxu0 0.0
    %974 = vmatprep.subr.mxu0 0.0
    %975 = vmatpush1.msra.mxu0 0.0
    %976 = vmatprep.subr.mxu0 0.0
    %977 = vmatpush1.msra.mxu0 0.0
    %978 = vmatprep.subr.mxu0 0.0
    %979 = vmatpush1.msra.mxu0 0.0
    %980 = vmatprep.subr.mxu0 0.0
    %981 = vmatpush1.msra.mxu0 0.0
    %982 = vmatprep.subr.mxu0 0.0
    %983 = vmatpush1.msra.mxu0 0.0
    %984 = vmatprep.subr.mxu0 0.0
    %985 = vmatpush1.msra.mxu0 0.0
    %986 = vmatprep.mubr.f32.mxu0 0.0
    %987 = vmatmul.mubr.f32.gmra.mrb[0].mxu0 %v920
    %v988 = vpop.f32.mrb[0].mxu0
    %v989 = vadd.f32 0.0, %v988
    %v990 = vpop.f32.mrb[0].mxu0
    %991 = vdwg.mxu0
    %v992 = vadd.f32 %v320, %v989
    %v993 = vxor.u32 %v992, 2147483648
    %v994 = vmul.f32 %v993, 1.442695
    %v995 = vpow.pop %v994
    %v996 = vadd.f32 %v995, 1.0
    %v997 = vrcp.pop %v996
    %v998 = vmul.f32 1.0, %v997
    %v999 = vmul.f32 %v998, 2.0
    %v1000 = vsub.f32 %v999, 1.0
    %v1001 = vmul.f32 %v998, %v910
    %1003 = vrot.lane.b32.xlu0 %v1000, 96
    %v1004 = vpop.permute.xlu0 %1003
    %v1006 = vmul.f32 %v998, %v1004
    %1008 = vrot.lane.b32.xlu0 %v1006, 16
    %v1009 = vpop.permute.xlu0 %1008
    %v1011 = vadd.f32 %v1001, %v1009
    %v1012 = vtanh.pop %v1011
    %1014 = vrot.lane.b32.xlu0 %v1012, 32
    %v1015 = vpop.permute.xlu0 %1014
    %v1017 = vmul.f32 %v998, %v1015
    %1019 = vrot.lane.b32.xlu0 %v1017, 80
    %v1020 = vpop.permute.xlu0 %1019
    %v1021 = vsel %vm615, %v1020, 0
    %1023 = vmatprep.subr.mxu0 0.0
    %1024 = vmatpush1.msra.mxu0 %v13
    %1025 = vmatprep.subr.mxu0 0.0
    %1026 = vmatpush1.msra.mxu0 %v14
    %1027 = vmatprep.subr.mxu0 0.0
    %1028 = vmatpush1.msra.mxu0 0.0
    %1029 = vmatprep.subr.mxu0 0.0
    %1030 = vmatpush1.msra.mxu0 0.0
    %1031 = vmatprep.subr.mxu0 0.0
    %1032 = vmatpush1.msra.mxu0 0.0
    %1033 = vmatprep.subr.mxu0 0.0
    %1034 = vmatpush1.msra.mxu0 0.0
    %1035 = vmatprep.subr.mxu0 0.0
    %1036 = vmatpush1.msra.mxu0 0.0
    %1037 = vmatprep.subr.mxu0 0.0
    %1038 = vmatpush1.msra.mxu0 0.0
    %1039 = vmatprep.subr.mxu0 0.0
    %1040 = vmatpush1.msra.mxu0 0.0
    %1041 = vmatprep.subr.mxu0 0.0
    %1042 = vmatpush1.msra.mxu0 0.0
    %1043 = vmatprep.subr.mxu0 0.0
    %1044 = vmatpush1.msra.mxu0 0.0
    %1045 = vmatprep.subr.mxu0 0.0
    %1046 = vmatpush1.msra.mxu0 0.0
    %1047 = vmatprep.subr.mxu0 0.0
    %1048 = vmatpush1.msra.mxu0 0.0
    %1049 = vmatprep.subr.mxu0 0.0
    %1050 = vmatpush1.msra.mxu0 0.0
    %1051 = vmatprep.subr.mxu0 0.0
    %1052 = vmatpush1.msra.mxu0 0.0
    %1053 = vmatprep.subr.mxu0 0.0
    %1054 = vmatpush1.msra.mxu0 0.0
    %1055 = vmatprep.subr.mxu0 0.0
    %1056 = vmatpush1.msra.mxu0 0.0
    %1057 = vmatprep.subr.mxu0 0.0
    %1058 = vmatpush1.msra.mxu0 0.0
    %1059 = vmatprep.subr.mxu0 0.0
    %1060 = vmatpush1.msra.mxu0 0.0
    %1061 = vmatprep.subr.mxu0 0.0
    %1062 = vmatpush1.msra.mxu0 0.0
    %1063 = vmatprep.subr.mxu0 0.0
    %1064 = vmatpush1.msra.mxu0 0.0
    %1065 = vmatprep.subr.mxu0 0.0
    %1066 = vmatpush1.msra.mxu0 0.0
    %1067 = vmatprep.subr.mxu0 0.0
    %1068 = vmatpush1.msra.mxu0 0.0
    %1069 = vmatprep.subr.mxu0 0.0
    %1070 = vmatpush1.msra.mxu0 0.0
    %1071 = vmatprep.subr.mxu0 0.0
    %1072 = vmatpush1.msra.mxu0 0.0
    %1073 = vmatprep.subr.mxu0 0.0
    %1074 = vmatpush1.msra.mxu0 0.0
    %1075 = vmatprep.subr.mxu0 0.0
    %1076 = vmatpush1.msra.mxu0 0.0
    %1077 = vmatprep.subr.mxu0 0.0
    %1078 = vmatpush1.msra.mxu0 0.0
    %1079 = vmatprep.subr.mxu0 0.0
    %1080 = vmatpush1.msra.mxu0 0.0
    %1081 = vmatprep.subr.mxu0 0.0
    %1082 = vmatpush1.msra.mxu0 0.0
    %1083 = vmatprep.subr.mxu0 0.0
    %1084 = vmatpush1.msra.mxu0 0.0
    %1085 = vmatprep.subr.mxu0 0.0
    %1086 = vmatpush1.msra.mxu0 0.0
    %1087 = vmatprep.mubr.f32.mxu0 0.0
    %1088 = vmatmul.mubr.f32.gmra.mrb[0].mxu0 %v1021
    %v1089 = vpop.f32.mrb[0].mxu0
    %v1090 = vadd.f32 0.0, %v1089
    %v1091 = vpop.f32.mrb[0].mxu0
    %1092 = vdwg.mxu0
    %v1093 = vadd.f32 %v393, %v1090
    %v1094 = vxor.u32 %v1093, 2147483648
    %v1095 = vmul.f32 %v1094, 1.442695
    %v1096 = vpow.pop %v1095
    %v1097 = vadd.f32 %v1096, 1.0
    %v1098 = vrcp.pop %v1097
    %v1099 = vmul.f32 1.0, %v1098
    %v1100 = vmul.f32 %v1099, 2.0
    %v1101 = vsub.f32 %v1100, 1.0
    %v1102 = vmul.f32 %v1099, %v1011
    %1104 = vrot.lane.b32.xlu0 %v1101, 96
    %v1105 = vpop.permute.xlu0 %1104
    %v1107 = vmul.f32 %v1099, %v1105
    %1109 = vrot.lane.b32.xlu0 %v1107, 16
    %v1110 = vpop.permute.xlu0 %1109
    %v1112 = vadd.f32 %v1102, %v1110
    %v1113 = vtanh.pop %v1112
    %1115 = vrot.lane.b32.xlu0 %v1113, 32
    %v1116 = vpop.permute.xlu0 %1115
    %v1118 = vmul.f32 %v1099, %v1116
    %1120 = vrot.lane.b32.xlu0 %v1118, 80
    %v1121 = vpop.permute.xlu0 %1120
    %v1122 = vsel %vm615, %v1121, 0
    %1124 = vmatprep.subr.mxu0 0.0
    %1125 = vmatpush1.msra.mxu0 %v13
    %1126 = vmatprep.subr.mxu0 0.0
    %1127 = vmatpush1.msra.mxu0 %v14
    %1128 = vmatprep.subr.mxu0 0.0
    %1129 = vmatpush1.msra.mxu0 0.0
    %1130 = vmatprep.subr.mxu0 0.0
    %1131 = vmatpush1.msra.mxu0 0.0
    %1132 = vmatprep.subr.mxu0 0.0
    %1133 = vmatpush1.msra.mxu0 0.0
    %1134 = vmatprep.subr.mxu0 0.0
    %1135 = vmatpush1.msra.mxu0 0.0
    %1136 = vmatprep.subr.mxu0 0.0
    %1137 = vmatpush1.msra.mxu0 0.0
    %1138 = vmatprep.subr.mxu0 0.0
    %1139 = vmatpush1.msra.mxu0 0.0
    %1140 = vmatprep.subr.mxu0 0.0
    %1141 = vmatpush1.msra.mxu0 0.0
    %1142 = vmatprep.subr.mxu0 0.0
    %1143 = vmatpush1.msra.mxu0 0.0
    %1144 = vmatprep.subr.mxu0 0.0
    %1145 = vmatpush1.msra.mxu0 0.0
    %1146 = vmatprep.subr.mxu0 0.0
    %1147 = vmatpush1.msra.mxu0 0.0
    %1148 = vmatprep.subr.mxu0 0.0
    %1149 = vmatpush1.msra.mxu0 0.0
    %1150 = vmatprep.subr.mxu0 0.0
    %1151 = vmatpush1.msra.mxu0 0.0
    %1152 = vmatprep.subr.mxu0 0.0
    %1153 = vmatpush1.msra.mxu0 0.0
    %1154 = vmatprep.subr.mxu0 0.0
    %1155 = vmatpush1.msra.mxu0 0.0
    %1156 = vmatprep.subr.mxu0 0.0
    %1157 = vmatpush1.msra.mxu0 0.0
    %1158 = vmatprep.subr.mxu0 0.0
    %1159 = vmatpush1.msra.mxu0 0.0
    %1160 = vmatprep.subr.mxu0 0.0
    %1161 = vmatpush1.msra.mxu0 0.0
    %1162 = vmatprep.subr.mxu0 0.0
    %1163 = vmatpush1.msra.mxu0 0.0
    %1164 = vmatprep.subr.mxu0 0.0
    %1165 = vmatpush1.msra.mxu0 0.0
    %1166 = vmatprep.subr.mxu0 0.0
    %1167 = vmatpush1.msra.mxu0 0.0
    %1168 = vmatprep.subr.mxu0 0.0
    %1169 = vmatpush1.msra.mxu0 0.0
    %1170 = vmatprep.subr.mxu0 0.0
    %1171 = vmatpush1.msra.mxu0 0.0
    %1172 = vmatprep.subr.mxu0 0.0
    %1173 = vmatpush1.msra.mxu0 0.0
    %1174 = vmatprep.subr.mxu0 0.0
    %1175 = vmatpush1.msra.mxu0 0.0
    %1176 = vmatprep.subr.mxu0 0.0
    %1177 = vmatpush1.msra.mxu0 0.0
    %1178 = vmatprep.subr.mxu0 0.0
    %1179 = vmatpush1.msra.mxu0 0.0
    %1180 = vmatprep.subr.mxu0 0.0
    %1181 = vmatpush1.msra.mxu0 0.0
    %1182 = vmatprep.subr.mxu0 0.0
    %1183 = vmatpush1.msra.mxu0 0.0
    %1184 = vmatprep.subr.mxu0 0.0
    %1185 = vmatpush1.msra.mxu0 0.0
    %1186 = vmatprep.subr.mxu0 0.0
    %1187 = vmatpush1.msra.mxu0 0.0
    %1188 = vmatprep.mubr.f32.mxu0 0.0
    %1189 = vmatmul.mubr.f32.gmra.mrb[0].mxu0 %v1122
    %v1190 = vpop.f32.mrb[0].mxu0
    %v1191 = vadd.f32 0.0, %v1190
    %v1192 = vpop.f32.mrb[0].mxu0
    %1193 = vdwg.mxu0
    %v1194 = vadd.f32 %v466, %v1191
    %v1195 = vxor.u32 %v1194, 2147483648
    %v1196 = vmul.f32 %v1195, 1.442695
    %v1197 = vpow.pop %v1196
    %v1198 = vadd.f32 %v1197, 1.0
    %v1199 = vrcp.pop %v1198
    %v1200 = vmul.f32 1.0, %v1199
    %v1201 = vmul.f32 %v1200, 2.0
    %v1202 = vsub.f32 %v1201, 1.0
    %v1203 = vmul.f32 %v1200, %v1112
    %1205 = vrot.lane.b32.xlu0 %v1202, 96
    %v1206 = vpop.permute.xlu0 %1205
    %v1208 = vmul.f32 %v1200, %v1206
    %1210 = vrot.lane.b32.xlu0 %v1208, 16
    %v1211 = vpop.permute.xlu0 %1210
    %v1213 = vadd.f32 %v1203, %v1211
    %v1214 = vtanh.pop %v1213
    %1216 = vrot.lane.b32.xlu0 %v1214, 32
    %v1217 = vpop.permute.xlu0 %1216
    %v1219 = vmul.f32 %v1200, %v1217
    %1221 = vrot.lane.b32.xlu0 %v1219, 80
    %v1222 = vpop.permute.xlu0 %1221
    %v1223 = vsel %vm615, %v1222, 0
    %1225 = vmatprep.subr.mxu0 0.0
    %1226 = vmatpush1.msra.mxu0 %v13
    %1227 = vmatprep.subr.mxu0 0.0
    %1228 = vmatpush1.msra.mxu0 %v14
    %1229 = vmatprep.subr.mxu0 0.0
    %1230 = vmatpush1.msra.mxu0 0.0
    %1231 = vmatprep.subr.mxu0 0.0
    %1232 = vmatpush1.msra.mxu0 0.0
    %1233 = vmatprep.subr.mxu0 0.0
    %1234 = vmatpush1.msra.mxu0 0.0
    %1235 = vmatprep.subr.mxu0 0.0
    %1236 = vmatpush1.msra.mxu0 0.0
    %1237 = vmatprep.subr.mxu0 0.0
    %1238 = vmatpush1.msra.mxu0 0.0
    %1239 = vmatprep.subr.mxu0 0.0
    %1240 = vmatpush1.msra.mxu0 0.0
    %1241 = vmatprep.subr.mxu0 0.0
    %1242 = vmatpush1.msra.mxu0 0.0
    %1243 = vmatprep.subr.mxu0 0.0
    %1244 = vmatpush1.msra.mxu0 0.0
    %1245 = vmatprep.subr.mxu0 0.0
    %1246 = vmatpush1.msra.mxu0 0.0
    %1247 = vmatprep.subr.mxu0 0.0
    %1248 = vmatpush1.msra.mxu0 0.0
    %1249 = vmatprep.subr.mxu0 0.0
    %1250 = vmatpush1.msra.mxu0 0.0
    %1251 = vmatprep.subr.mxu0 0.0
    %1252 = vmatpush1.msra.mxu0 0.0
    %1253 = vmatprep.subr.mxu0 0.0
    %1254 = vmatpush1.msra.mxu0 0.0
    %1255 = vmatprep.subr.mxu0 0.0
    %1256 = vmatpush1.msra.mxu0 0.0
    %1257 = vmatprep.subr.mxu0 0.0
    %1258 = vmatpush1.msra.mxu0 0.0
    %1259 = vmatprep.subr.mxu0 0.0
    %1260 = vmatpush1.msra.mxu0 0.0
    %1261 = vmatprep.subr.mxu0 0.0
    %1262 = vmatpush1.msra.mxu0 0.0
    %1263 = vmatprep.subr.mxu0 0.0
    %1264 = vmatpush1.msra.mxu0 0.0
    %1265 = vmatprep.subr.mxu0 0.0
    %1266 = vmatpush1.msra.mxu0 0.0
    %1267 = vmatprep.subr.mxu0 0.0
    %1268 = vmatpush1.msra.mxu0 0.0
    %1269 = vmatprep.subr.mxu0 0.0
    %1270 = vmatpush1.msra.mxu0 0.0
    %1271 = vmatprep.subr.mxu0 0.0
    %1272 = vmatpush1.msra.mxu0 0.0
    %1273 = vmatprep.subr.mxu0 0.0
    %1274 = vmatpush1.msra.mxu0 0.0
    %1275 = vmatprep.subr.mxu0 0.0
    %1276 = vmatpush1.msra.mxu0 0.0
    %1277 = vmatprep.subr.mxu0 0.0
    %1278 = vmatpush1.msra.mxu0 0.0
    %1279 = vmatprep.subr.mxu0 0.0
    %1280 = vmatpush1.msra.mxu0 0.0
    %1281 = vmatprep.subr.mxu0 0.0
    %1282 = vmatpush1.msra.mxu0 0.0
    %1283 = vmatprep.subr.mxu0 0.0
    %1284 = vmatpush1.msra.mxu0 0.0
    %1285 = vmatprep.subr.mxu0 0.0
    %1286 = vmatpush1.msra.mxu0 0.0
    %1287 = vmatprep.subr.mxu0 0.0
    %1288 = vmatpush1.msra.mxu0 0.0
    %1289 = vmatprep.mubr.f32.mxu0 0.0
    %1290 = vmatmul.mubr.f32.gmra.mrb[0].mxu0 %v1223
    %v1291 = vpop.f32.mrb[0].mxu0
    %v1292 = vadd.f32 0.0, %v1291
    %v1293 = vpop.f32.mrb[0].mxu0
    %1294 = vdwg.mxu0
    %v1295 = vadd.f32 %v539, %v1292
    %v1296 = vxor.u32 %v1295, 2147483648
    %v1297 = vmul.f32 %v1296, 1.442695
    %v1298 = vpow.pop %v1297
    %v1299 = vadd.f32 %v1298, 1.0
    %v1300 = vrcp.pop %v1299
    %v1301 = vmul.f32 1.0, %v1300
    %v1302 = vmul.f32 %v1301, 2.0
    %v1303 = vsub.f32 %v1302, 1.0
    %v1304 = vmul.f32 %v1301, %v1213
    %1306 = vrot.lane.b32.xlu0 %v1303, 96
    %v1307 = vpop.permute.xlu0 %1306
    %v1309 = vmul.f32 %v1301, %v1307
    %1311 = vrot.lane.b32.xlu0 %v1309, 16
    %v1312 = vpop.permute.xlu0 %1311
    %v1314 = vadd.f32 %v1304, %v1312
    %v1315 = vtanh.pop %v1314
    %1317 = vrot.lane.b32.xlu0 %v1315, 32
    %v1318 = vpop.permute.xlu0 %1317
    %v1320 = vmul.f32 %v1301, %v1318
    %1322 = vrot.lane.b32.xlu0 %v1320, 80
    %v1323 = vpop.permute.xlu0 %1322
    %v1324 = vsel %vm615, %v1323, 0
    %1326 = vmatprep.subr.mxu0 0.0
    %1327 = vmatpush1.msra.mxu0 %v13
    %1328 = vmatprep.subr.mxu0 0.0
    %1329 = vmatpush1.msra.mxu0 %v14
    %1330 = vmatprep.subr.mxu0 0.0
    %1331 = vmatpush1.msra.mxu0 0.0
    %1332 = vmatprep.subr.mxu0 0.0
    %1333 = vmatpush1.msra.mxu0 0.0
    %1334 = vmatprep.subr.mxu0 0.0
    %1335 = vmatpush1.msra.mxu0 0.0
    %1336 = vmatprep.subr.mxu0 0.0
    %1337 = vmatpush1.msra.mxu0 0.0
    %1338 = vmatprep.subr.mxu0 0.0
    %1339 = vmatpush1.msra.mxu0 0.0
    %1340 = vmatprep.subr.mxu0 0.0
    %1341 = vmatpush1.msra.mxu0 0.0
    %1342 = vmatprep.subr.mxu0 0.0
    %1343 = vmatpush1.msra.mxu0 0.0
    %1344 = vmatprep.subr.mxu0 0.0
    %1345 = vmatpush1.msra.mxu0 0.0
    %1346 = vmatprep.subr.mxu0 0.0
    %1347 = vmatpush1.msra.mxu0 0.0
    %1348 = vmatprep.subr.mxu0 0.0
    %1349 = vmatpush1.msra.mxu0 0.0
    %1350 = vmatprep.subr.mxu0 0.0
    %1351 = vmatpush1.msra.mxu0 0.0
    %1352 = vmatprep.subr.mxu0 0.0
    %1353 = vmatpush1.msra.mxu0 0.0
    %1354 = vmatprep.subr.mxu0 0.0
    %1355 = vmatpush1.msra.mxu0 0.0
    %1356 = vmatprep.subr.mxu0 0.0
    %1357 = vmatpush1.msra.mxu0 0.0
    %1358 = vmatprep.subr.mxu0 0.0
    %1359 = vmatpush1.msra.mxu0 0.0
    %1360 = vmatprep.subr.mxu0 0.0
    %1361 = vmatpush1.msra.mxu0 0.0
    %1362 = vmatprep.subr.mxu0 0.0
    %1363 = vmatpush1.msra.mxu0 0.0
    %1364 = vmatprep.subr.mxu0 0.0
    %1365 = vmatpush1.msra.mxu0 0.0
    %1366 = vmatprep.subr.mxu0 0.0
    %1367 = vmatpush1.msra.mxu0 0.0
    %1368 = vmatprep.subr.mxu0 0.0
    %1369 = vmatpush1.msra.mxu0 0.0
    %1370 = vmatprep.subr.mxu0 0.0
    %1371 = vmatpush1.msra.mxu0 0.0
    %1372 = vmatprep.subr.mxu0 0.0
    %1373 = vmatpush1.msra.mxu0 0.0
    %1374 = vmatprep.subr.mxu0 0.0
    %1375 = vmatpush1.msra.mxu0 0.0
    %1376 = vmatprep.subr.mxu0 0.0
    %1377 = vmatpush1.msra.mxu0 0.0
    %1378 = vmatprep.subr.mxu0 0.0
    %1379 = vmatpush1.msra.mxu0 0.0
    %1380 = vmatprep.subr.mxu0 0.0
    %1381 = vmatpush1.msra.mxu0 0.0
    %1382 = vmatprep.subr.mxu0 0.0
    %1383 = vmatpush1.msra.mxu0 0.0
    %1384 = vmatprep.subr.mxu0 0.0
    %1385 = vmatpush1.msra.mxu0 0.0
    %1386 = vmatprep.subr.mxu0 0.0
    %1387 = vmatpush1.msra.mxu0 0.0
    %1388 = vmatprep.subr.mxu0 0.0
    %1389 = vmatpush1.msra.mxu0 0.0
    %1390 = vmatprep.mubr.f32.mxu0 0.0
    %1391 = vmatmul.mubr.f32.gmra.mrb[0].mxu0 %v1324
    %v1392 = vpop.f32.mrb[0].mxu0
    %v1393 = vadd.f32 0.0, %v1392
    %v1394 = vpop.f32.mrb[0].mxu0
    %1395 = vdwg.mxu0
    %v1396 = vadd.f32 %v612, %v1393
    %v1397 = vxor.u32 %v1396, 2147483648
    %v1398 = vmul.f32 %v1397, 1.442695
    %v1399 = vpow.pop %v1398
    %v1400 = vadd.f32 %v1399, 1.0
    %v1401 = vrcp.pop %v1400
    %v1402 = vmul.f32 1.0, %v1401
    %v1403 = vmul.f32 %v1402, 2.0
    %v1404 = vsub.f32 %v1403, 1.0
    %v1405 = vmul.f32 %v1402, %v1314
    %1407 = vrot.lane.b32.xlu0 %v1404, 96
    %v1408 = vpop.permute.xlu0 %1407
    %v1410 = vmul.f32 %v1402, %v1408
    %1412 = vrot.lane.b32.xlu0 %v1410, 16
    %v1413 = vpop.permute.xlu0 %1412
    %v1415 = vadd.f32 %v1405, %v1413
    %v1416 = vtanh.pop %v1415
    %1418 = vrot.lane.b32.xlu0 %v1416, 32
    %v1419 = vpop.permute.xlu0 %1418
    %v1421 = vmul.f32 %v1402, %v1419
    %1423 = vset.pattern.permute.xlu0 0
    %1424 = vperm.xlu0 %1423, %v17
    %v1425 = vpop.permute.xlu0 %1424
    %1428 = vrot.lane.b32.xlu0 %v1421, 80
    %v1429 = vpop.permute.xlu0 %1428
    %v1431 = vsel %vm615, %v16, 0
    %v1433 = vsel %vm615, %v1429, 0
    %1435 = vmatprep.subr.mxu0 0.0
    %1436 = vmatpush1.xpose.msra.mxu0 %v1433
    %1437 = vmatprep.subr.mxu0 0.0
    %1438 = vmatpush1.xpose.msra.mxu0 0.0
    %1439 = vmatprep.subr.mxu0 0.0
    %1440 = vmatpush1.xpose.msra.mxu0 0.0
    %1441 = vmatprep.subr.mxu0 0.0
    %1442 = vmatpush1.xpose.msra.mxu0 0.0
    %1443 = vmatprep.subr.mxu0 0.0
    %1444 = vmatpush1.xpose.msra.mxu0 0.0
    %1445 = vmatprep.subr.mxu0 0.0
    %1446 = vmatpush1.xpose.msra.mxu0 0.0
    %1447 = vmatprep.subr.mxu0 0.0
    %1448 = vmatpush1.xpose.msra.mxu0 0.0
    %1449 = vmatprep.subr.mxu0 0.0
    %1450 = vmatpush1.xpose.msra.mxu0 0.0
    %1451 = vmatprep.subr.mxu0 0.0
    %1452 = vmatpush1.xpose.msra.mxu0 0.0
    %1453 = vmatprep.subr.mxu0 0.0
    %1454 = vmatpush1.xpose.msra.mxu0 0.0
    %1455 = vmatprep.subr.mxu0 0.0
    %1456 = vmatpush1.xpose.msra.mxu0 0.0
    %1457 = vmatprep.subr.mxu0 0.0
    %1458 = vmatpush1.xpose.msra.mxu0 0.0
    %1459 = vmatprep.subr.mxu0 0.0
    %1460 = vmatpush1.xpose.msra.mxu0 0.0
    %1461 = vmatprep.subr.mxu0 0.0
    %1462 = vmatpush1.xpose.msra.mxu0 0.0
    %1463 = vmatprep.subr.mxu0 0.0
    %1464 = vmatpush1.xpose.msra.mxu0 0.0
    %1465 = vmatprep.subr.mxu0 0.0
    %1466 = vmatpush1.xpose.msra.mxu0 0.0
    %1467 = vmatprep.subr.mxu0 0.0
    %1468 = vmatpush1.xpose.msra.mxu0 0.0
    %1469 = vmatprep.subr.mxu0 0.0
    %1470 = vmatpush1.xpose.msra.mxu0 0.0
    %1471 = vmatprep.subr.mxu0 0.0
    %1472 = vmatpush1.xpose.msra.mxu0 0.0
    %1473 = vmatprep.subr.mxu0 0.0
    %1474 = vmatpush1.xpose.msra.mxu0 0.0
    %1475 = vmatprep.subr.mxu0 0.0
    %1476 = vmatpush1.xpose.msra.mxu0 0.0
    %1477 = vmatprep.subr.mxu0 0.0
    %1478 = vmatpush1.xpose.msra.mxu0 0.0
    %1479 = vmatprep.subr.mxu0 0.0
    %1480 = vmatpush1.xpose.msra.mxu0 0.0
    %1481 = vmatprep.subr.mxu0 0.0
    %1482 = vmatpush1.xpose.msra.mxu0 0.0
    %1483 = vmatprep.subr.mxu0 0.0
    %1484 = vmatpush1.xpose.msra.mxu0 0.0
    %1485 = vmatprep.subr.mxu0 0.0
    %1486 = vmatpush1.xpose.msra.mxu0 0.0
    %1487 = vmatprep.subr.mxu0 0.0
    %1488 = vmatpush1.xpose.msra.mxu0 0.0
    %1489 = vmatprep.subr.mxu0 0.0
    %1490 = vmatpush1.xpose.msra.mxu0 0.0
    %1491 = vmatprep.subr.mxu0 0.0
    %1492 = vmatpush1.xpose.msra.mxu0 0.0
    %1493 = vmatprep.subr.mxu0 0.0
    %1494 = vmatpush1.xpose.msra.mxu0 0.0
    %1495 = vmatprep.subr.mxu0 0.0
    %1496 = vmatpush1.xpose.msra.mxu0 0.0
    %1497 = vmatprep.subr.mxu0 0.0
    %1498 = vmatpush1.xpose.msra.mxu0 0.0
    %1499 = vmatprep.mubr.f32.mxu0 0.0
    %1500 = vmatmul.mubr.f32.gmra.mrb[0].mxu0 %v1431
    %v1501 = vpop.f32.mrb[0].mxu0
    %v1502 = vadd.f32 %v1425, %v1501
    %v1503 = vpop.f32.mrb[0].mxu0
    %1504 = vdwg.mxu0
    %vm1505 = vcmask 8192
    %1506 = vst.msk [vmem:[#allocation2] sm:$0x1] %vm1505, %v1502
    // Predicated region
    $region10: #{naive_lstm_forward.1} parent=1 // pred_check
      _
    $region11: #{naive_lstm_forward.1} parent=1 // pred_check_branch
      %1508 = sbr.rel (0) target = $region13
    $region12: #{naive_lstm_forward.1} parent=1 // pred_region
      %s1510 = ssub.s32 16, 16
      %1511 = vsyncadd [#allocation3], %s1510
      %s1513 = sshll.u32 [#allocation2], 4
      %s1514 = int_to_ptr.vmem [resolvable:$true] %s1513
      %1516 = dma.vmem_to_hbm [thread:$0]  %s1514, 16, %s2, [#allocation3]
    $region13: #{naive_lstm_forward.1} parent=1 // pred_fallthru
      _
    // Predicated region
    $region14: #{naive_lstm_forward.1} parent=1 // pred_check
      _
    $region15: #{naive_lstm_forward.1} parent=1 // pred_check_branch
      %1518 = sbr.rel (0) target = $region17
    $region16: #{naive_lstm_forward.1} parent=1 // pred_region
      %1519 = dma.done [#allocation3], 16
    $region17: #{naive_lstm_forward.1} parent=1 // pred_fallthru
      _
    %1520 = vsyncpa [#allocation3], 1

</llo_original>
